<compile_context>
chip_gen: v5e
topology: v5e:2x2
jax: 0.10.0
libtpu: 0.0.40
codegen_flags: <defaults>
</compile_context>

<pallas_src>
import functools

import jax
import jax.numpy as jnp
from jax.experimental import pallas as pl
from jax.experimental.pallas import tpu as pltpu


def _conv_kernel(x_ref, w_ref, b_ref, o_ref, patch_ref, *, H, W, K, Cin, Cout):
    """One batch element per grid step.

    x_ref:     (1, Cin, Hp, Wp)   zero-padded input, channels-first
    w_ref:     (Cout, K*K*Cin)    all taps folded into one contraction dim
    b_ref:     (Cout, 1)          bias
    o_ref:     (1, Cout, H*W)     lane-dense output (last dim = H*W)
    patch_ref: (K*K*Cin, H*W)     VMEM im2col scratch
    """
    HW = H * W

    # Build the im2col patch in VMEM: rows [tap*Cin, tap*Cin+Cin) hold the
    # (Cin, H*W) window shifted by (kh, kw).  All data expansion stays in VMEM.
    for kh in range(K):
        for kw in range(K):
            tap = kh * K + kw
            win = x_ref[0, :, kh:kh + H, kw:kw + W]            # (Cin, H, W)
            patch_ref[pl.ds(tap * Cin, Cin), :] = win.reshape(Cin, HW)

    # Single MXU contraction: (Cout, K*K*Cin) @ (K*K*Cin, H*W) -> (Cout, H*W).
    # Spatial sits on lanes -> lane-dense accumulator and unmasked stores.
    acc = jnp.dot(w_ref[...], patch_ref[...], preferred_element_type=jnp.float32)
    acc = acc + b_ref[...].astype(jnp.float32)                  # broadcast (Cout, 1)
    o_ref[0, :, :] = acc.astype(o_ref.dtype)


def conv2d_hw_invariant(x_nchw, weight_oihw, bias):
    """Same-padding stride-1 conv. x: (N, Cin, H, W); weight: (Cout, Cin, K, K)."""
    N, Cin, H, W = x_nchw.shape
    Cout, _, K, _ = weight_oihw.shape
    assert K % 2 == 1
    pad = (K - 1) // 2
    Hp, Wp = H + K - 1, W + K - 1
    HW = H * W

    # Stay channels-first; only zero-pad the spatial dims ("same" padding).
    x_pad = jnp.pad(x_nchw, ((0, 0), (0, 0), (pad, pad), (pad, pad)))

    # (Cout, Cin, K, K) -> (Cout, K*K*Cin), tap-major to match the im2col patch:
    # w2[o, (kh*K + kw)*Cin + c] = weight[o, c, kh, kw]
    w2 = jnp.transpose(weight_oihw, (0, 2, 3, 1)).reshape(Cout, K * K * Cin)
    b2 = bias.reshape(Cout, 1)

    kernel = functools.partial(_conv_kernel, H=H, W=W, K=K, Cin=Cin, Cout=Cout)

    # TODO(synk): for large images, tile H with a (K-1)-row halo and raise
    # vmem_limit_bytes so the block footprint stays within v7x's 64 MiB VMEM.
    out = pl.pallas_call(
        kernel,
        out_shape=jax.ShapeDtypeStruct((N, Cout, HW), x_nchw.dtype),
        grid_spec=pltpu.PrefetchScalarGridSpec(
            num_scalar_prefetch=0,
            grid=(N,),
            in_specs=[
                pl.BlockSpec((1, Cin, Hp, Wp), lambda n: (n, 0, 0, 0)),
                pl.BlockSpec((Cout, K * K * Cin), lambda n: (0, 0)),
                pl.BlockSpec((Cout, 1), lambda n: (0, 0)),
            ],
            out_specs=pl.BlockSpec((1, Cout, HW), lambda n: (n, 0, 0)),
            scratch_shapes=[pltpu.VMEM((K * K * Cin, HW), jnp.float32)],
        ),
        compiler_params=pltpu.CompilerParams(
            dimension_semantics=("parallel",),
        ),
    )(x_pad, w2, b2)

    # (N, Cout, H*W) -> (N, Cout, H, W): contiguous reshape, no transpose.
    return out.reshape(N, Cout, H, W)


if __name__ == "__main__":
    # Module config: in_channels=4, out_channels=8, kernel_size=3, bias=True
    N, Cin, Cout, H, W, K = 2, 4, 8, 16, 16, 3

    key = jax.random.PRNGKey(0)
    kx, kw, kb = jax.random.split(key, 3)

    x = jax.random.normal(kx, (N, Cin, H, W), dtype=jnp.float32)
    # Deterministic init mimicking nn.Conv2d's uniform(-bound, bound), bound = 1/sqrt(fan_in)
    fan_in = Cin * K * K
    bound = 1.0 / jnp.sqrt(float(fan_in))
    weight = jax.random.uniform(kw, (Cout, Cin, K, K), jnp.float32, -bound, bound)
    bias = jax.random.uniform(kb, (Cout,), jnp.float32, -bound, bound)

    out = conv2d_hw_invariant(x, weight, bias)
    out = jax.block_until_ready(out)

    # Reference: XLA conv with same semantics (NCHW, OIHW, stride 1, same padding).
    ref = jax.lax.conv_general_dilated(
        x, weight, window_strides=(1, 1), padding="SAME",
        dimension_numbers=("NCHW", "OIHW", "NCHW"),
    ) + bias.reshape(1, Cout, 1, 1)

    assert out.shape == (N, Cout, H, W)
    assert jnp.allclose(out, ref, atol=1e-4, rtol=1e-4)
    print("KERNEL_OK")
</pallas_src>

<mosaic_0001>
module attributes {stable_mosaic.version = 11 : i64} {
  func.func @_conv_kernel(%arg0: i32, %arg1: memref<1x4x18x18xf32, #tpu.memory_space<vmem>>, %arg2: memref<8x36xf32, #tpu.memory_space<vmem>>, %arg3: memref<8x1xf32, #tpu.memory_space<vmem>>, %arg4: memref<1x8x256xf32, #tpu.memory_space<vmem>>, %arg5: memref<36x256xf32, #tpu.memory_space<vmem>>) attributes {dimension_semantics = [#tpu.dimension_semantics<parallel>], iteration_bounds = array<i64: 2>, scalar_prefetch = 0 : i64, scratch_operands = 1 : i64, tpu.core_type = #tpu.core_type<tc>, window_params = [{transform_indices = @transform_0, window_bounds = array<i64: 1, 4, 18, 18>}, {pipeline_mode = #tpu.pipeline_mode<synchronous>, transform_indices = @transform_1, window_bounds = array<i64: 8, 36>}, {pipeline_mode = #tpu.pipeline_mode<synchronous>, transform_indices = @transform_2, window_bounds = array<i64: 8, 1>}, {transform_indices = @transform_3, window_bounds = array<i64: 1, 8, 256>}]} {
    %c0 = arith.constant 0 : index
    %c0_0 = arith.constant 0 : index
    %c0_1 = arith.constant 0 : index
    %c0_2 = arith.constant 0 : index
    %0 = vector.load %arg1[%c0, %c0_0, %c0_1, %c0_2] : memref<1x4x18x18xf32, #tpu.memory_space<vmem>>, vector<1x4x16x16xf32>
    %1 = vector.shape_cast %0 : vector<1x4x16x16xf32> to vector<4x16x16xf32>
    %2 = vector.shape_cast %1 : vector<4x16x16xf32> to vector<4x256xf32>
    %c0_3 = arith.constant 0 : index
    %c0_4 = arith.constant 0 : index
    %3 = vector.load %arg5[%c0_3, %c0_4] : memref<36x256xf32, #tpu.memory_space<vmem>>, vector<4x256xf32>
    tpu.vector_store %arg5[%c0_3, %c0_4], %2 {strides = array<i32>} : memref<36x256xf32, #tpu.memory_space<vmem>>, vector<4x256xf32>,
    %c0_5 = arith.constant 0 : index
    %c0_6 = arith.constant 0 : index
    %c0_7 = arith.constant 0 : index
    %c1 = arith.constant 1 : index
    %4 = vector.load %arg1[%c0_5, %c0_6, %c0_7, %c1] : memref<1x4x18x18xf32, #tpu.memory_space<vmem>>, vector<1x4x16x16xf32>
    %5 = vector.shape_cast %4 : vector<1x4x16x16xf32> to vector<4x16x16xf32>
    %6 = vector.shape_cast %5 : vector<4x16x16xf32> to vector<4x256xf32>
    %c4 = arith.constant 4 : index
    %c0_8 = arith.constant 0 : index
    %7 = vector.load %arg5[%c4, %c0_8] : memref<36x256xf32, #tpu.memory_space<vmem>>, vector<4x256xf32>
    tpu.vector_store %arg5[%c4, %c0_8], %6 {strides = array<i32>} : memref<36x256xf32, #tpu.memory_space<vmem>>, vector<4x256xf32>,
    %c0_9 = arith.constant 0 : index
    %c0_10 = arith.constant 0 : index
    %c0_11 = arith.constant 0 : index
    %c2 = arith.constant 2 : index
    %8 = vector.load %arg1[%c0_9, %c0_10, %c0_11, %c2] : memref<1x4x18x18xf32, #tpu.memory_space<vmem>>, vector<1x4x16x16xf32>
    %9 = vector.shape_cast %8 : vector<1x4x16x16xf32> to vector<4x16x16xf32>
    %10 = vector.shape_cast %9 : vector<4x16x16xf32> to vector<4x256xf32>
    %c8 = arith.constant 8 : index
    %c0_12 = arith.constant 0 : index
    %11 = vector.load %arg5[%c8, %c0_12] : memref<36x256xf32, #tpu.memory_space<vmem>>, vector<4x256xf32>
    tpu.vector_store %arg5[%c8, %c0_12], %10 {strides = array<i32>} : memref<36x256xf32, #tpu.memory_space<vmem>>, vector<4x256xf32>,
    %c0_13 = arith.constant 0 : index
    %c0_14 = arith.constant 0 : index
    %c1_15 = arith.constant 1 : index
    %c0_16 = arith.constant 0 : index
    %12 = vector.load %arg1[%c0_13, %c0_14, %c1_15, %c0_16] : memref<1x4x18x18xf32, #tpu.memory_space<vmem>>, vector<1x4x16x16xf32>
    %13 = vector.shape_cast %12 : vector<1x4x16x16xf32> to vector<4x16x16xf32>
    %14 = vector.shape_cast %13 : vector<4x16x16xf32> to vector<4x256xf32>
    %c12 = arith.constant 12 : index
    %c0_17 = arith.constant 0 : index
    %15 = vector.load %arg5[%c12, %c0_17] : memref<36x256xf32, #tpu.memory_space<vmem>>, vector<4x256xf32>
    tpu.vector_store %arg5[%c12, %c0_17], %14 {strides = array<i32>} : memref<36x256xf32, #tpu.memory_space<vmem>>, vector<4x256xf32>,
    %c0_18 = arith.constant 0 : index
    %c0_19 = arith.constant 0 : index
    %c1_20 = arith.constant 1 : index
    %c1_21 = arith.constant 1 : index
    %16 = vector.load %arg1[%c0_18, %c0_19, %c1_20, %c1_21] : memref<1x4x18x18xf32, #tpu.memory_space<vmem>>, vector<1x4x16x16xf32>
    %17 = vector.shape_cast %16 : vector<1x4x16x16xf32> to vector<4x16x16xf32>
    %18 = vector.shape_cast %17 : vector<4x16x16xf32> to vector<4x256xf32>
    %c16 = arith.constant 16 : index
    %c0_22 = arith.constant 0 : index
    %19 = vector.load %arg5[%c16, %c0_22] : memref<36x256xf32, #tpu.memory_space<vmem>>, vector<4x256xf32>
    tpu.vector_store %arg5[%c16, %c0_22], %18 {strides = array<i32>} : memref<36x256xf32, #tpu.memory_space<vmem>>, vector<4x256xf32>,
    %c0_23 = arith.constant 0 : index
    %c0_24 = arith.constant 0 : index
    %c1_25 = arith.constant 1 : index
    %c2_26 = arith.constant 2 : index
    %20 = vector.load %arg1[%c0_23, %c0_24, %c1_25, %c2_26] : memref<1x4x18x18xf32, #tpu.memory_space<vmem>>, vector<1x4x16x16xf32>
    %21 = vector.shape_cast %20 : vector<1x4x16x16xf32> to vector<4x16x16xf32>
    %22 = vector.shape_cast %21 : vector<4x16x16xf32> to vector<4x256xf32>
    %c20 = arith.constant 20 : index
    %c0_27 = arith.constant 0 : index
    %23 = vector.load %arg5[%c20, %c0_27] : memref<36x256xf32, #tpu.memory_space<vmem>>, vector<4x256xf32>
    tpu.vector_store %arg5[%c20, %c0_27], %22 {strides = array<i32>} : memref<36x256xf32, #tpu.memory_space<vmem>>, vector<4x256xf32>,
    %c0_28 = arith.constant 0 : index
    %c0_29 = arith.constant 0 : index
    %c2_30 = arith.constant 2 : index
    %c0_31 = arith.constant 0 : index
    %24 = vector.load %arg1[%c0_28, %c0_29, %c2_30, %c0_31] : memref<1x4x18x18xf32, #tpu.memory_space<vmem>>, vector<1x4x16x16xf32>
    %25 = vector.shape_cast %24 : vector<1x4x16x16xf32> to vector<4x16x16xf32>
    %26 = vector.shape_cast %25 : vector<4x16x16xf32> to vector<4x256xf32>
    %c24 = arith.constant 24 : index
    %c0_32 = arith.constant 0 : index
    %27 = vector.load %arg5[%c24, %c0_32] : memref<36x256xf32, #tpu.memory_space<vmem>>, vector<4x256xf32>
    tpu.vector_store %arg5[%c24, %c0_32], %26 {strides = array<i32>} : memref<36x256xf32, #tpu.memory_space<vmem>>, vector<4x256xf32>,
    %c0_33 = arith.constant 0 : index
    %c0_34 = arith.constant 0 : index
    %c2_35 = arith.constant 2 : index
    %c1_36 = arith.constant 1 : index
    %28 = vector.load %arg1[%c0_33, %c0_34, %c2_35, %c1_36] : memref<1x4x18x18xf32, #tpu.memory_space<vmem>>, vector<1x4x16x16xf32>
    %29 = vector.shape_cast %28 : vector<1x4x16x16xf32> to vector<4x16x16xf32>
    %30 = vector.shape_cast %29 : vector<4x16x16xf32> to vector<4x256xf32>
    %c28 = arith.constant 28 : index
    %c0_37 = arith.constant 0 : index
    %31 = vector.load %arg5[%c28, %c0_37] : memref<36x256xf32, #tpu.memory_space<vmem>>, vector<4x256xf32>
    tpu.vector_store %arg5[%c28, %c0_37], %30 {strides = array<i32>} : memref<36x256xf32, #tpu.memory_space<vmem>>, vector<4x256xf32>,
    %c0_38 = arith.constant 0 : index
    %c0_39 = arith.constant 0 : index
    %c2_40 = arith.constant 2 : index
    %c2_41 = arith.constant 2 : index
    %32 = vector.load %arg1[%c0_38, %c0_39, %c2_40, %c2_41] : memref<1x4x18x18xf32, #tpu.memory_space<vmem>>, vector<1x4x16x16xf32>
    %33 = vector.shape_cast %32 : vector<1x4x16x16xf32> to vector<4x16x16xf32>
    %34 = vector.shape_cast %33 : vector<4x16x16xf32> to vector<4x256xf32>
    %c32 = arith.constant 32 : index
    %c0_42 = arith.constant 0 : index
    %35 = vector.load %arg5[%c32, %c0_42] : memref<36x256xf32, #tpu.memory_space<vmem>>, vector<4x256xf32>
    tpu.vector_store %arg5[%c32, %c0_42], %34 {strides = array<i32>} : memref<36x256xf32, #tpu.memory_space<vmem>>, vector<4x256xf32>,
    %c0_43 = arith.constant 0 : index
    %c0_44 = arith.constant 0 : index
    %36 = vector.load %arg2[%c0_43, %c0_44] : memref<8x36xf32, #tpu.memory_space<vmem>>, vector<8x36xf32>
    %c0_45 = arith.constant 0 : index
    %c0_46 = arith.constant 0 : index
    %37 = vector.load %arg5[%c0_45, %c0_46] : memref<36x256xf32, #tpu.memory_space<vmem>>, vector<36x256xf32>
    %cst = arith.constant dense<0.000000e+00> : vector<8x256xf32>
    %38 = tpu.matmul %36, %37, %cst {dimension_numbers = #tpu.dot_dimension_numbers<[1], [0], [0], [1], [0, 0, 1, 1], [], []>} : vector<8x36xf32>, vector<36x256xf32>, vector<8x256xf32> -> vector<8x256xf32>
    %c0_47 = arith.constant 0 : index
    %c0_48 = arith.constant 0 : index
    %39 = vector.load %arg3[%c0_47, %c0_48] : memref<8x1xf32, #tpu.memory_space<vmem>>, vector<8x1xf32>
    %40 = vector.broadcast %39 : vector<8x1xf32> to vector<8x256xf32>
    %41 = arith.addf %38, %40 : vector<8x256xf32>
    %c0_49 = arith.constant 0 : index
    %c0_50 = arith.constant 0 : index
    %c0_51 = arith.constant 0 : index
    %42 = vector.load %arg4[%c0_49, %c0_50, %c0_51] : memref<1x8x256xf32, #tpu.memory_space<vmem>>, vector<1x8x256xf32>
    %43 = vector.shape_cast %42 : vector<1x8x256xf32> to vector<8x256xf32>
    %44 = vector.shape_cast %41 : vector<8x256xf32> to vector<1x8x256xf32>
    tpu.vector_store %arg4[%c0_49, %c0_50, %c0_51], %44 {strides = array<i32>} : memref<1x8x256xf32, #tpu.memory_space<vmem>>, vector<1x8x256xf32>,
    return
  }
  func.func @transform_0(%arg0: i32) -> (i32, i32, i32, i32) {
    %c0_i32 = arith.constant 0 : i32
    %c0_i32_0 = arith.constant 0 : i32
    %c0_i32_1 = arith.constant 0 : i32
    %c0_i32_2 = arith.constant 0 : i32
    return %arg0, %c0_i32, %c0_i32_0, %c0_i32_1 : i32, i32, i32, i32
  }
  func.func @transform_1(%arg0: i32) -> (i32, i32) {
    %c0_i32 = arith.constant 0 : i32
    %c0_i32_0 = arith.constant 0 : i32
    %c0_i32_1 = arith.constant 0 : i32
    return %c0_i32, %c0_i32_0 : i32, i32
  }
  func.func @transform_2(%arg0: i32) -> (i32, i32) {
    %c0_i32 = arith.constant 0 : i32
    %c0_i32_0 = arith.constant 0 : i32
    %c0_i32_1 = arith.constant 0 : i32
    return %c0_i32, %c0_i32_0 : i32, i32
  }
  func.func @transform_3(%arg0: i32) -> (i32, i32, i32) {
    %c0_i32 = arith.constant 0 : i32
    %c0_i32_0 = arith.constant 0 : i32
    %c0_i32_1 = arith.constant 0 : i32
    return %arg0, %c0_i32, %c0_i32_0 : i32, i32, i32
  }
}

</mosaic_0001>

<llo_original>
// kernel: tpu_custom_call.1
$region0: #{tpu_custom_call.1}
  #allocation0 [shape = 'u32[]', space=smem, size = 0x4, offset = 0x4, fixed_abs, tag = 'smem constant byte address 0x4 - core index']
  #allocation1 [shape = 'u32[72,128]{1,0:T(1,128)}', space=vmem, size = 0x9000, scoped, tag = 'internal scratch']
  #allocation2 [shape = 'f32[36,256]{1,0:T(8,128)}', space=vmem, size = 0xa000, scoped, tag = 'scratch operand']
  %s0 = inlined_call_operand.vmem [shape: f32[2,4,18,18], index: 0, kind: input, shape index: {}]
  %s1 = inlined_call_operand.vmem [shape: f32[8,36], index: 1, kind: input, shape index: {}]
  %s2 = inlined_call_operand.vmem [shape: f32[8,1], index: 2, kind: input, shape index: {}]
  %s3 = inlined_call_operand.hbm [shape: f32[2,8,256], index: 3, kind: output, shape index: {}]
  %s4 = sld [smem:[#allocation0]]
  $region45: #{tpu_custom_call.1} parent=0
    _
  %s6 = ssub.s32 1, %s4
  %s7 = scalar_select 0, %s6, %s4
  $region1: #{tpu_custom_call.1} parent=0
    #allocation3 [shape = 'u8[16384]{0}', space=vmem, size = 0x4000, scoped, tag = 'output window, operand 0']
    #allocation4 [shape = 's32[2]{0}', space=sflag, size = 0x8, scoped, tag = 'scoped memory for tpu_custom_call.1']
    %8 = vsyncpa [#allocation4], 0
    %s9 = scalar_lea.sflag [#allocation4], 1
    %10 = vsyncpa %s9, 0
    loop: start=0, step=1, limit=4
    $region2: #{tpu_custom_call.1} parent=1 // loop_pre_header
      _
    $region3: #{tpu_custom_call.1} parent=1 // loop_header
      %s12 = sphi 0, %s16
      %p13 = scmp.ge.s32.totalorder %s12, 4
      %s22 = sphi 0, %s24
      %s25 = sphi 0, %s22
      %s26 = sphi 0, %s25
      %s42 = sphi 0, %s26
      %s46 = sphi 0, %s46
      %s48 = sphi 0, %s46
      %s49 = sphi 0, %s48
      %s63 = sphi 0, %s49
      %s67 = sphi 0, %s67
      %s69 = sphi 0, %s67
      %s70 = sphi 0, %s69
      %s84 = sphi 0, %s70
      %s90 = sphi 0, %s92
      %s93 = sphi 0, %s90
      %s94 = sphi 0, %s93
      %s110 = sphi 0, %s94
    $region4: #{tpu_custom_call.1} parent=1 // loop_header_branch
      %15 = sbr.rel (%p13) target = $region8
    $region5: #{tpu_custom_call.1} parent=1 // loop_body
      %s17 = ssub.s32 %s12, 1
      %s18 = ssub.s32 %s12, 2
      %s19 = sadd.s32 %s12, 1
      %s20 = ssub.s32 %s12, %s19
      %p21 = scmp.eq.s32.totalorder %s20, 0
      %s23 = sadd.s32 %s22, 1
      %s24 = scalar_select %p21, %s22, %s23
      %p27 = pneg %p21
      %p28 = scmp.eq.s32.totalorder %s12, 1
      %p29 = por %p27, %p28
      %p30 = scmp.ne.s32.totalorder %s22, %s25
      %p31 = scmp.eq.s32.totalorder %s12, 0
      %p32 = por %p30, %p31
      %p33 = scmp.ne.s32.totalorder %s22, %s25
      %p34 = scmp.eq.s32.totalorder %s17, 1
      %p35 = por %p33, %p34
      %p36 = scmp.ne.s32.totalorder %s25, %s26
      %p37 = scmp.eq.s32.totalorder %s17, 0
      %p38 = por %p36, %p37
      %p39 = scmp.ne.s32.totalorder %s25, %s26
      %p40 = scmp.eq.s32.totalorder %s18, 1
      %p41 = por %p39, %p40
      %p43 = scmp.ne.s32.totalorder %s26, %s42
      %p44 = scmp.eq.s32.totalorder %s18, 0
      %p45 = por %p43, %p44
      %s47 = sadd.s32 %s46, 1
      %p50 = scmp.eq.s32.totalorder %s12, 1
      %p51 = scmp.ne.s32.totalorder %s46, %s48
      %p52 = scmp.eq.s32.totalorder %s12, 0
      %p53 = por %p51, %p52
      %p54 = scmp.ne.s32.totalorder %s46, %s48
      %p55 = scmp.eq.s32.totalorder %s17, 1
      %p56 = por %p54, %p55
      %p57 = scmp.ne.s32.totalorder %s48, %s49
      %p58 = scmp.eq.s32.totalorder %s17, 0
      %p59 = por %p57, %p58
      %p60 = scmp.ne.s32.totalorder %s48, %s49
      %p61 = scmp.eq.s32.totalorder %s18, 1
      %p62 = por %p60, %p61
      %p64 = scmp.ne.s32.totalorder %s49, %s63
      %p65 = scmp.eq.s32.totalorder %s18, 0
      %p66 = por %p64, %p65
      %s68 = sadd.s32 %s67, 1
      %p71 = scmp.eq.s32.totalorder %s12, 1
      %p72 = scmp.ne.s32.totalorder %s67, %s69
      %p73 = scmp.eq.s32.totalorder %s12, 0
      %p74 = por %p72, %p73
      %p75 = scmp.ne.s32.totalorder %s67, %s69
      %p76 = scmp.eq.s32.totalorder %s17, 1
      %p77 = por %p75, %p76
      %p78 = scmp.ne.s32.totalorder %s69, %s70
      %p79 = scmp.eq.s32.totalorder %s17, 0
      %p80 = por %p78, %p79
      %p81 = scmp.ne.s32.totalorder %s69, %s70
      %p82 = scmp.eq.s32.totalorder %s18, 1
      %p83 = por %p81, %p82
      %p85 = scmp.ne.s32.totalorder %s70, %s84
      %p86 = scmp.eq.s32.totalorder %s18, 0
      %p87 = por %p85, %p86
      %s88 = ssub.s32 %s12, %s19
      %p89 = scmp.eq.s32.totalorder %s88, 0
      %s91 = sadd.s32 %s90, 1
      %s92 = scalar_select %p89, %s90, %s91
      %p95 = pneg %p89
      %p96 = scmp.eq.s32.totalorder %s12, 1
      %p97 = por %p95, %p96
      %p98 = scmp.ne.s32.totalorder %s90, %s93
      %p99 = scmp.eq.s32.totalorder %s12, 0
      %p100 = por %p98, %p99
      %p101 = scmp.ne.s32.totalorder %s90, %s93
      %p102 = scmp.eq.s32.totalorder %s17, 1
      %p103 = por %p101, %p102
      %p104 = scmp.ne.s32.totalorder %s93, %s94
      %p105 = scmp.eq.s32.totalorder %s17, 0
      %p106 = por %p104, %p105
      %p107 = scmp.ne.s32.totalorder %s93, %s94
      %p108 = scmp.eq.s32.totalorder %s18, 1
      %p109 = por %p107, %p108
      %p111 = scmp.ne.s32.totalorder %s94, %s110
      %p112 = scmp.eq.s32.totalorder %s18, 0
      %p113 = por %p111, %p112
      %p114 = scmp.le.s32.totalorder 1, %s12
      %p115 = scmp.lt.s32.totalorder %s12, 3
      %p116 = pnand %p114, %p115
      %p117 = pneg %p116
      // Predicated region
      $region9: #{tpu_custom_call.1} parent=5 // pred_check
        _
      $region10: #{tpu_custom_call.1} parent=5 // pred_check_branch
        %119 = sbr.rel (%p116) target = $region12
      $region11: #{tpu_custom_call.1} parent=5 // pred_region
        %s120 = ssub.s32 %s12, 1
        // Predicated region
        $region13: #{tpu_custom_call.1} parent=11 // pred_check
          %p121 = pneg %p59
        $region14: #{tpu_custom_call.1} parent=11 // pred_check_branch
          %123 = sbr.rel (%p121) target = $region16
        $region15: #{tpu_custom_call.1} parent=11 // pred_region
          _
        $region16: #{tpu_custom_call.1} parent=11 // pred_fallthru
          _
        // Predicated region
        $region17: #{tpu_custom_call.1} parent=11 // pred_check
          %p124 = pneg %p80
        $region18: #{tpu_custom_call.1} parent=11 // pred_check_branch
          %126 = sbr.rel (%p124) target = $region20
        $region19: #{tpu_custom_call.1} parent=11 // pred_region
          _
        $region20: #{tpu_custom_call.1} parent=11 // pred_fallthru
          _
      $region12: #{tpu_custom_call.1} parent=5 // pred_fallthru
        _
      %p127 = scmp.lt.s32.totalorder %s12, 2
      // Predicated region
      $region21: #{tpu_custom_call.1} parent=5 // pred_check
        %p128 = pneg %p127
      $region22: #{tpu_custom_call.1} parent=5 // pred_check_branch
        %130 = sbr.rel (%p128) target = $region24
      $region23: #{tpu_custom_call.1} parent=5 // pred_region
        // Predicated region
        $region25: #{tpu_custom_call.1} parent=23 // pred_check
          %p131 = pneg %p32
        $region26: #{tpu_custom_call.1} parent=23 // pred_check_branch
          %133 = sbr.rel (%p131) target = $region28
        $region27: #{tpu_custom_call.1} parent=23 // pred_region
          %p134 = scmp.lt.s32.totalorder %s12, 1
          %s135 = scalar_select %p134, %s12, 1
          %s136 = smul.addr %s135, 12
          %s137 = smul.addr %s136, 8
          %s138 = scalar_lea.vmem %s0, %s137
        $region28: #{tpu_custom_call.1} parent=23 // pred_fallthru
          _
      $region24: #{tpu_custom_call.1} parent=5 // pred_fallthru
        _
      %p139 = scmp.le.s32.totalorder 1, %s12
      %p140 = scmp.lt.s32.totalorder %s12, 3
      %p141 = pnand %p139, %p140
      %p142 = pneg %p141
      // Predicated region
      $region29: #{tpu_custom_call.1} parent=5 // pred_check
        _
      $region30: #{tpu_custom_call.1} parent=5 // pred_check_branch
        %144 = sbr.rel (%p141) target = $region32
      $region31: #{tpu_custom_call.1} parent=5 // pred_region
        %s145 = ssub.s32 %s12, 1
        %p146 = scmp.lt.s32.totalorder %s17, 1
        %s147 = scalar_select %p146, %s17, 1
        %s148 = smul.addr %s147, 12
        %s149 = smul.addr %s148, 8
        %s150 = scalar_lea.vmem %s0, %s149
        %p151 = pneg %p38
        %p152 = pneg %p35
        %p153 = pneg %p59
        %p154 = pneg %p56
        %p155 = pneg %p80
        %p156 = pneg %p77
        %p157 = pneg %p106
        %p158 = pneg %p103
        %s159 = sand.u32 %s93, 1
        %s160 = scalar_lea.sflag [#allocation4], %s159
        %s161 = sand.u32 %s93, 1
        %s162 = smul.addr %s161, 16
        %s163 = scalar_lea.vmem [#allocation3], %s162
        %p164 = scmp.lt.s32.totalorder %s17, 1
        %s165 = scalar_select %p164, %s17, 1
        %s166 = smul.addr %s165, 12
        %s167 = smul.addr %s166, 8
        %s168 = scalar_lea.vmem %s0, %s167
        %v169 = vld [vmem:[%s168] sm:$0xff]
        %v170 = vld [vmem:[%s168 + $0x8] sm:$0xff]
        %v171 = vld [vmem:[%s168 + $0x18] sm:$0xff]
        %v172 = vld [vmem:[%s168 + $0x20] sm:$0xff]
        %v173 = vld [vmem:[%s168 + $0x30] sm:$0xff]
        %v174 = vld [vmem:[%s168 + $0x38] sm:$0xff]
        %v175 = vld [vmem:[%s168 + $0x48] sm:$0xff]
        %v176 = vld [vmem:[%s168 + $0x50] sm:$0xff]
        %v177 = vrot.slane %v173, 4
        %vm178 = vcmask 1047556
        %v179 = vsel %vm178, %v177, %v169
        %v180 = vrot.slane %v169, 4
        %v181 = vsel %vm178, %v173, %v180
        %v183 = vunpack.c.l.s4 1983009808
        %v184 = vunpack.c.0.s8 %v183
        %v185 = vperm.slane %v179, %v184
        %v187 = vunpack.c.l.s4 1983009808
        %v188 = vunpack.c.0.s8 %v187
        %v189 = vperm.slane %v181, %v188
        %v190 = vrot.slane %v175, 4
        %v191 = vsel %vm178, %v190, %v171
        %v192 = vrot.slane %v171, 4
        %v193 = vsel %vm178, %v175, %v192
        %v195 = vunpack.c.l.s4 1983009808
        %v196 = vunpack.c.0.s8 %v195
        %v197 = vperm.slane %v191, %v196
        %v199 = vunpack.c.l.s4 1983009808
        %v200 = vunpack.c.0.s8 %v199
        %v201 = vperm.slane %v193, %v200
        %v202 = vrot.slane %v197, 4
        %v203 = vsel %vm178, %v202, %v185
        %v204 = vrot.slane %v185, 4
        %v205 = vsel %vm178, %v197, %v204
        %v207 = vunpack.c.l.s4 1934713408
        %v208 = vunpack.c.0.s8 %v207
        %v209 = vperm.slane %v203, %v208
        %v211 = vunpack.c.l.s4 1934713408
        %v212 = vunpack.c.0.s8 %v211
        %v213 = vperm.slane %v205, %v212
        %v214 = vrot.slane %v201, 4
        %v215 = vsel %vm178, %v214, %v189
        %v216 = vrot.slane %v189, 4
        %v217 = vsel %vm178, %v201, %v216
        %v219 = vunpack.c.l.s4 1934713408
        %v220 = vunpack.c.0.s8 %v219
        %v221 = vperm.slane %v215, %v220
        %v223 = vunpack.c.l.s4 1934713408
        %v224 = vunpack.c.0.s8 %v223
        %v225 = vperm.slane %v217, %v224
        %v226 = vrot.slane %v209, 4
        %v227 = vsel %vm178, 0.0, %v226
        %v228 = vrot.slane %v213, 4
        %v229 = vsel %vm178, 0.0, %v228
        %v230 = vrot.slane %v221, 4
        %v231 = vsel %vm178, 0.0, %v230
        %v232 = vrot.slane %v225, 4
        %v233 = vsel %vm178, 0.0, %v232
        %v234 = vrot.slane %v174, 4
        %v235 = vsel %vm178, %v234, %v170
        %v236 = vrot.slane %v170, 4
        %v237 = vsel %vm178, %v174, %v236
        %v239 = vunpack.c.l.s4 1983009808
        %v240 = vunpack.c.0.s8 %v239
        %v241 = vperm.slane %v235, %v240
        %v243 = vunpack.c.l.s4 1983009808
        %v244 = vunpack.c.0.s8 %v243
        %v245 = vperm.slane %v237, %v244
        %v246 = vrot.slane %v176, 4
        %v247 = vsel %vm178, %v246, %v172
        %v248 = vrot.slane %v172, 4
        %v249 = vsel %vm178, %v176, %v248
        %v251 = vunpack.c.l.s4 1983009808
        %v252 = vunpack.c.0.s8 %v251
        %v253 = vperm.slane %v247, %v252
        %v255 = vunpack.c.l.s4 1983009808
        %v256 = vunpack.c.0.s8 %v255
        %v257 = vperm.slane %v249, %v256
        %v258 = vrot.slane %v253, 4
        %v259 = vsel %vm178, %v258, %v241
        %v260 = vrot.slane %v241, 4
        %v261 = vsel %vm178, %v253, %v260
        %v263 = vunpack.c.l.s4 1934713408
        %v264 = vunpack.c.0.s8 %v263
        %v265 = vperm.slane %v259, %v264
        %v267 = vunpack.c.l.s4 1934713408
        %v268 = vunpack.c.0.s8 %v267
        %v269 = vperm.slane %v261, %v268
        %v270 = vrot.slane %v257, 4
        %v271 = vsel %vm178, %v270, %v245
        %v272 = vrot.slane %v245, 4
        %v273 = vsel %vm178, %v257, %v272
        %v275 = vunpack.c.l.s4 1934713408
        %v276 = vunpack.c.0.s8 %v275
        %v277 = vperm.slane %v271, %v276
        %v279 = vunpack.c.l.s4 1934713408
        %v280 = vunpack.c.0.s8 %v279
        %v281 = vperm.slane %v273, %v280
        %v282 = vrot.slane %v265, 4
        %v283 = vsel %vm178, 0.0, %v282
        %v284 = vrot.slane %v269, 4
        %v285 = vsel %vm178, 0.0, %v284
        %v286 = vrot.slane %v277, 4
        %v287 = vsel %vm178, 0.0, %v286
        %v288 = vrot.slane %v281, 4
        %v289 = vsel %vm178, 0.0, %v288
        %291 = vrot.lane.b32.xlu0 %v227, 16
        %v292 = vpop.permute.xlu0 %291
        %295 = vrot.lane.b32.xlu0 %v213, 32
        %v296 = vpop.permute.xlu0 %295
        %299 = vrot.lane.b32.xlu0 %v229, 48
        %v300 = vpop.permute.xlu0 %299
        %303 = vrot.lane.b32.xlu0 %v221, 64
        %v304 = vpop.permute.xlu0 %303
        %307 = vrot.lane.b32.xlu0 %v231, 80
        %v308 = vpop.permute.xlu0 %307
        %311 = vrot.lane.b32.xlu0 %v225, 96
        %v312 = vpop.permute.xlu0 %311
        %315 = vrot.lane.b32.xlu0 %v233, 112
        %v316 = vpop.permute.xlu0 %315
        %319 = vrot.lane.b32.xlu0 %v283, 16
        %v320 = vpop.permute.xlu0 %319
        %323 = vrot.lane.b32.xlu0 %v269, 32
        %v324 = vpop.permute.xlu0 %323
        %327 = vrot.lane.b32.xlu0 %v285, 48
        %v328 = vpop.permute.xlu0 %327
        %331 = vrot.lane.b32.xlu0 %v277, 64
        %v332 = vpop.permute.xlu0 %331
        %335 = vrot.lane.b32.xlu0 %v287, 80
        %v336 = vpop.permute.xlu0 %335
        %339 = vrot.lane.b32.xlu0 %v281, 96
        %v340 = vpop.permute.xlu0 %339
        %343 = vrot.lane.b32.xlu0 %v289, 112
        %v344 = vpop.permute.xlu0 %343
        %vm346 = vcmask 130048
        %v347 = vsel %vm346, %v209, %v292
        %vm348 = vcmask 261120
        %v349 = vsel %vm348, %v347, %v296
        %vm350 = vcmask 392192
        %v351 = vsel %vm350, %v349, %v300
        %vm352 = vcmask 523264
        %v353 = vsel %vm352, %v351, %v304
        %vm354 = vcmask 654336
        %v355 = vsel %vm354, %v353, %v308
        %vm356 = vcmask 785408
        %v357 = vsel %vm356, %v355, %v312
        %vm358 = vcmask 916480
        %v359 = vsel %vm358, %v357, %v316
        %v360 = vsel %vm346, %v265, %v320
        %v361 = vsel %vm348, %v360, %v324
        %v362 = vsel %vm350, %v361, %v328
        %v363 = vsel %vm352, %v362, %v332
        %v364 = vsel %vm354, %v363, %v336
        %v365 = vsel %vm356, %v364, %v340
        %v366 = vsel %vm358, %v365, %v344
        %367 = vst [vmem:[#allocation2] sm:$0xf] %v359
        %368 = vst [vmem:[#allocation2 + $0x8] sm:$0xf] %v366
        %v369 = vld [vmem:[%s168] sm:$0xff]
        %v370 = vld [vmem:[%s168 + $0x8] sm:$0xff]
        %v371 = vld [vmem:[%s168 + $0x18] sm:$0xff]
        %v372 = vld [vmem:[%s168 + $0x20] sm:$0xff]
        %v373 = vld [vmem:[%s168 + $0x30] sm:$0xff]
        %v374 = vld [vmem:[%s168 + $0x38] sm:$0xff]
        %v375 = vld [vmem:[%s168 + $0x48] sm:$0xff]
        %v376 = vld [vmem:[%s168 + $0x50] sm:$0xff]
        %385 = vrot.lane.b32.xlu0 %v369, 127
        %v386 = vpop.permute.xlu0 %385
        %387 = vrot.lane.b32.xlu0 %v370, 127
        %v388 = vpop.permute.xlu0 %387
        %389 = vrot.lane.b32.xlu0 %v371, 127
        %v390 = vpop.permute.xlu0 %389
        %391 = vrot.lane.b32.xlu0 %v372, 127
        %v392 = vpop.permute.xlu0 %391
        %393 = vrot.lane.b32.xlu0 %v373, 127
        %v394 = vpop.permute.xlu0 %393
        %395 = vrot.lane.b32.xlu0 %v374, 127
        %v396 = vpop.permute.xlu0 %395
        %397 = vrot.lane.b32.xlu0 %v375, 127
        %v398 = vpop.permute.xlu0 %397
        %399 = vrot.lane.b32.xlu0 %v376, 127
        %v400 = vpop.permute.xlu0 %399
        %v409 = vrot.slane %v394, 4
        %v410 = vsel %vm178, %v409, %v386
        %v411 = vrot.slane %v386, 4
        %v412 = vsel %vm178, %v394, %v411
        %v414 = vunpack.c.l.s4 1983009808
        %v415 = vunpack.c.0.s8 %v414
        %v416 = vperm.slane %v410, %v415
        %v418 = vunpack.c.l.s4 1983009808
        %v419 = vunpack.c.0.s8 %v418
        %v420 = vperm.slane %v412, %v419
        %v421 = vrot.slane %v398, 4
        %v422 = vsel %vm178, %v421, %v390
        %v423 = vrot.slane %v390, 4
        %v424 = vsel %vm178, %v398, %v423
        %v426 = vunpack.c.l.s4 1983009808
        %v427 = vunpack.c.0.s8 %v426
        %v428 = vperm.slane %v422, %v427
        %v430 = vunpack.c.l.s4 1983009808
        %v431 = vunpack.c.0.s8 %v430
        %v432 = vperm.slane %v424, %v431
        %v433 = vrot.slane %v428, 4
        %v434 = vsel %vm178, %v433, %v416
        %v435 = vrot.slane %v416, 4
        %v436 = vsel %vm178, %v428, %v435
        %v438 = vunpack.c.l.s4 1934713408
        %v439 = vunpack.c.0.s8 %v438
        %v440 = vperm.slane %v434, %v439
        %v442 = vunpack.c.l.s4 1934713408
        %v443 = vunpack.c.0.s8 %v442
        %v444 = vperm.slane %v436, %v443
        %v445 = vrot.slane %v432, 4
        %v446 = vsel %vm178, %v445, %v420
        %v447 = vrot.slane %v420, 4
        %v448 = vsel %vm178, %v432, %v447
        %v450 = vunpack.c.l.s4 1934713408
        %v451 = vunpack.c.0.s8 %v450
        %v452 = vperm.slane %v446, %v451
        %v454 = vunpack.c.l.s4 1934713408
        %v455 = vunpack.c.0.s8 %v454
        %v456 = vperm.slane %v448, %v455
        %v457 = vrot.slane %v440, 4
        %v458 = vsel %vm178, 0.0, %v457
        %v459 = vrot.slane %v444, 4
        %v460 = vsel %vm178, 0.0, %v459
        %v461 = vrot.slane %v452, 4
        %v462 = vsel %vm178, 0.0, %v461
        %v463 = vrot.slane %v456, 4
        %v464 = vsel %vm178, 0.0, %v463
        %v465 = vrot.slane %v396, 4
        %v466 = vsel %vm178, %v465, %v388
        %v467 = vrot.slane %v388, 4
        %v468 = vsel %vm178, %v396, %v467
        %v470 = vunpack.c.l.s4 1983009808
        %v471 = vunpack.c.0.s8 %v470
        %v472 = vperm.slane %v466, %v471
        %v474 = vunpack.c.l.s4 1983009808
        %v475 = vunpack.c.0.s8 %v474
        %v476 = vperm.slane %v468, %v475
        %v477 = vrot.slane %v400, 4
        %v478 = vsel %vm178, %v477, %v392
        %v479 = vrot.slane %v392, 4
        %v480 = vsel %vm178, %v400, %v479
        %v482 = vunpack.c.l.s4 1983009808
        %v483 = vunpack.c.0.s8 %v482
        %v484 = vperm.slane %v478, %v483
        %v486 = vunpack.c.l.s4 1983009808
        %v487 = vunpack.c.0.s8 %v486
        %v488 = vperm.slane %v480, %v487
        %v489 = vrot.slane %v484, 4
        %v490 = vsel %vm178, %v489, %v472
        %v491 = vrot.slane %v472, 4
        %v492 = vsel %vm178, %v484, %v491
        %v494 = vunpack.c.l.s4 1934713408
        %v495 = vunpack.c.0.s8 %v494
        %v496 = vperm.slane %v490, %v495
        %v498 = vunpack.c.l.s4 1934713408
        %v499 = vunpack.c.0.s8 %v498
        %v500 = vperm.slane %v492, %v499
        %v501 = vrot.slane %v488, 4
        %v502 = vsel %vm178, %v501, %v476
        %v503 = vrot.slane %v476, 4
        %v504 = vsel %vm178, %v488, %v503
        %v506 = vunpack.c.l.s4 1934713408
        %v507 = vunpack.c.0.s8 %v506
        %v508 = vperm.slane %v502, %v507
        %v510 = vunpack.c.l.s4 1934713408
        %v511 = vunpack.c.0.s8 %v510
        %v512 = vperm.slane %v504, %v511
        %v513 = vrot.slane %v496, 4
        %v514 = vsel %vm178, 0.0, %v513
        %v515 = vrot.slane %v500, 4
        %v516 = vsel %vm178, 0.0, %v515
        %v517 = vrot.slane %v508, 4
        %v518 = vsel %vm178, 0.0, %v517
        %v519 = vrot.slane %v512, 4
        %v520 = vsel %vm178, 0.0, %v519
        %522 = vrot.lane.b32.xlu0 %v458, 16
        %v523 = vpop.permute.xlu0 %522
        %526 = vrot.lane.b32.xlu0 %v444, 32
        %v527 = vpop.permute.xlu0 %526
        %530 = vrot.lane.b32.xlu0 %v460, 48
        %v531 = vpop.permute.xlu0 %530
        %534 = vrot.lane.b32.xlu0 %v452, 64
        %v535 = vpop.permute.xlu0 %534
        %538 = vrot.lane.b32.xlu0 %v462, 80
        %v539 = vpop.permute.xlu0 %538
        %542 = vrot.lane.b32.xlu0 %v456, 96
        %v543 = vpop.permute.xlu0 %542
        %546 = vrot.lane.b32.xlu0 %v464, 112
        %v547 = vpop.permute.xlu0 %546
        %550 = vrot.lane.b32.xlu0 %v514, 16
        %v551 = vpop.permute.xlu0 %550
        %554 = vrot.lane.b32.xlu0 %v500, 32
        %v555 = vpop.permute.xlu0 %554
        %558 = vrot.lane.b32.xlu0 %v516, 48
        %v559 = vpop.permute.xlu0 %558
        %562 = vrot.lane.b32.xlu0 %v508, 64
        %v563 = vpop.permute.xlu0 %562
        %566 = vrot.lane.b32.xlu0 %v518, 80
        %v567 = vpop.permute.xlu0 %566
        %570 = vrot.lane.b32.xlu0 %v512, 96
        %v571 = vpop.permute.xlu0 %570
        %574 = vrot.lane.b32.xlu0 %v520, 112
        %v575 = vpop.permute.xlu0 %574
        %v577 = vsel %vm346, %v440, %v523
        %v578 = vsel %vm348, %v577, %v527
        %v579 = vsel %vm350, %v578, %v531
        %v580 = vsel %vm352, %v579, %v535
        %v581 = vsel %vm354, %v580, %v539
        %v582 = vsel %vm356, %v581, %v543
        %v583 = vsel %vm358, %v582, %v547
        %v584 = vsel %vm346, %v496, %v551
        %v585 = vsel %vm348, %v584, %v555
        %v586 = vsel %vm350, %v585, %v559
        %v587 = vsel %vm352, %v586, %v563
        %v588 = vsel %vm354, %v587, %v567
        %v589 = vsel %vm356, %v588, %v571
        %v590 = vsel %vm358, %v589, %v575
        %v593 = vrot.slane %v583, 4
        %v594 = vrot.slane %v590, 4
        %597 = vst [vmem:[#allocation2] sm:$0xf0] %v593
        %598 = vst [vmem:[#allocation2 + $0x8] sm:$0xf0] %v594
        %v599 = vld [vmem:[%s168] sm:$0xff]
        %v600 = vld [vmem:[%s168 + $0x8] sm:$0xff]
        %v601 = vld [vmem:[%s168 + $0x18] sm:$0xff]
        %v602 = vld [vmem:[%s168 + $0x20] sm:$0xff]
        %v603 = vld [vmem:[%s168 + $0x30] sm:$0xff]
        %v604 = vld [vmem:[%s168 + $0x38] sm:$0xff]
        %v605 = vld [vmem:[%s168 + $0x48] sm:$0xff]
        %v606 = vld [vmem:[%s168 + $0x50] sm:$0xff]
        %615 = vrot.lane.b32.xlu0 %v599, 126
        %v616 = vpop.permute.xlu0 %615
        %617 = vrot.lane.b32.xlu0 %v600, 126
        %v618 = vpop.permute.xlu0 %617
        %619 = vrot.lane.b32.xlu0 %v601, 126
        %v620 = vpop.permute.xlu0 %619
        %621 = vrot.lane.b32.xlu0 %v602, 126
        %v622 = vpop.permute.xlu0 %621
        %623 = vrot.lane.b32.xlu0 %v603, 126
        %v624 = vpop.permute.xlu0 %623
        %625 = vrot.lane.b32.xlu0 %v604, 126
        %v626 = vpop.permute.xlu0 %625
        %627 = vrot.lane.b32.xlu0 %v605, 126
        %v628 = vpop.permute.xlu0 %627
        %629 = vrot.lane.b32.xlu0 %v606, 126
        %v630 = vpop.permute.xlu0 %629
        %v639 = vrot.slane %v624, 4
        %v640 = vsel %vm178, %v639, %v616
        %v641 = vrot.slane %v616, 4
        %v642 = vsel %vm178, %v624, %v641
        %v644 = vunpack.c.l.s4 1983009808
        %v645 = vunpack.c.0.s8 %v644
        %v646 = vperm.slane %v640, %v645
        %v648 = vunpack.c.l.s4 1983009808
        %v649 = vunpack.c.0.s8 %v648
        %v650 = vperm.slane %v642, %v649
        %v651 = vrot.slane %v628, 4
        %v652 = vsel %vm178, %v651, %v620
        %v653 = vrot.slane %v620, 4
        %v654 = vsel %vm178, %v628, %v653
        %v656 = vunpack.c.l.s4 1983009808
        %v657 = vunpack.c.0.s8 %v656
        %v658 = vperm.slane %v652, %v657
        %v660 = vunpack.c.l.s4 1983009808
        %v661 = vunpack.c.0.s8 %v660
        %v662 = vperm.slane %v654, %v661
        %v663 = vrot.slane %v658, 4
        %v664 = vsel %vm178, %v663, %v646
        %v665 = vrot.slane %v646, 4
        %v666 = vsel %vm178, %v658, %v665
        %v668 = vunpack.c.l.s4 1934713408
        %v669 = vunpack.c.0.s8 %v668
        %v670 = vperm.slane %v664, %v669
        %v672 = vunpack.c.l.s4 1934713408
        %v673 = vunpack.c.0.s8 %v672
        %v674 = vperm.slane %v666, %v673
        %v675 = vrot.slane %v662, 4
        %v676 = vsel %vm178, %v675, %v650
        %v677 = vrot.slane %v650, 4
        %v678 = vsel %vm178, %v662, %v677
        %v680 = vunpack.c.l.s4 1934713408
        %v681 = vunpack.c.0.s8 %v680
        %v682 = vperm.slane %v676, %v681
        %v684 = vunpack.c.l.s4 1934713408
        %v685 = vunpack.c.0.s8 %v684
        %v686 = vperm.slane %v678, %v685
        %v687 = vrot.slane %v670, 4
        %v688 = vsel %vm178, 0.0, %v687
        %v689 = vrot.slane %v674, 4
        %v690 = vsel %vm178, 0.0, %v689
        %v691 = vrot.slane %v682, 4
        %v692 = vsel %vm178, 0.0, %v691
        %v693 = vrot.slane %v686, 4
        %v694 = vsel %vm178, 0.0, %v693
        %v695 = vrot.slane %v626, 4
        %v696 = vsel %vm178, %v695, %v618
        %v697 = vrot.slane %v618, 4
        %v698 = vsel %vm178, %v626, %v697
        %v700 = vunpack.c.l.s4 1983009808
        %v701 = vunpack.c.0.s8 %v700
        %v702 = vperm.slane %v696, %v701
        %v704 = vunpack.c.l.s4 1983009808
        %v705 = vunpack.c.0.s8 %v704
        %v706 = vperm.slane %v698, %v705
        %v707 = vrot.slane %v630, 4
        %v708 = vsel %vm178, %v707, %v622
        %v709 = vrot.slane %v622, 4
        %v710 = vsel %vm178, %v630, %v709
        %v712 = vunpack.c.l.s4 1983009808
        %v713 = vunpack.c.0.s8 %v712
        %v714 = vperm.slane %v708, %v713
        %v716 = vunpack.c.l.s4 1983009808
        %v717 = vunpack.c.0.s8 %v716
        %v718 = vperm.slane %v710, %v717
        %v719 = vrot.slane %v714, 4
        %v720 = vsel %vm178, %v719, %v702
        %v721 = vrot.slane %v702, 4
        %v722 = vsel %vm178, %v714, %v721
        %v724 = vunpack.c.l.s4 1934713408
        %v725 = vunpack.c.0.s8 %v724
        %v726 = vperm.slane %v720, %v725
        %v728 = vunpack.c.l.s4 1934713408
        %v729 = vunpack.c.0.s8 %v728
        %v730 = vperm.slane %v722, %v729
        %v731 = vrot.slane %v718, 4
        %v732 = vsel %vm178, %v731, %v706
        %v733 = vrot.slane %v706, 4
        %v734 = vsel %vm178, %v718, %v733
        %v736 = vunpack.c.l.s4 1934713408
        %v737 = vunpack.c.0.s8 %v736
        %v738 = vperm.slane %v732, %v737
        %v740 = vunpack.c.l.s4 1934713408
        %v741 = vunpack.c.0.s8 %v740
        %v742 = vperm.slane %v734, %v741
        %v743 = vrot.slane %v726, 4
        %v744 = vsel %vm178, 0.0, %v743
        %v745 = vrot.slane %v730, 4
        %v746 = vsel %vm178, 0.0, %v745
        %v747 = vrot.slane %v738, 4
        %v748 = vsel %vm178, 0.0, %v747
        %v749 = vrot.slane %v742, 4
        %v750 = vsel %vm178, 0.0, %v749
        %752 = vrot.lane.b32.xlu0 %v688, 16
        %v753 = vpop.permute.xlu0 %752
        %756 = vrot.lane.b32.xlu0 %v674, 32
        %v757 = vpop.permute.xlu0 %756
        %760 = vrot.lane.b32.xlu0 %v690, 48
        %v761 = vpop.permute.xlu0 %760
        %764 = vrot.lane.b32.xlu0 %v682, 64
        %v765 = vpop.permute.xlu0 %764
        %768 = vrot.lane.b32.xlu0 %v692, 80
        %v769 = vpop.permute.xlu0 %768
        %772 = vrot.lane.b32.xlu0 %v686, 96
        %v773 = vpop.permute.xlu0 %772
        %776 = vrot.lane.b32.xlu0 %v694, 112
        %v777 = vpop.permute.xlu0 %776
        %780 = vrot.lane.b32.xlu0 %v744, 16
        %v781 = vpop.permute.xlu0 %780
        %784 = vrot.lane.b32.xlu0 %v730, 32
        %v785 = vpop.permute.xlu0 %784
        %788 = vrot.lane.b32.xlu0 %v746, 48
        %v789 = vpop.permute.xlu0 %788
        %792 = vrot.lane.b32.xlu0 %v738, 64
        %v793 = vpop.permute.xlu0 %792
        %796 = vrot.lane.b32.xlu0 %v748, 80
        %v797 = vpop.permute.xlu0 %796
        %800 = vrot.lane.b32.xlu0 %v742, 96
        %v801 = vpop.permute.xlu0 %800
        %804 = vrot.lane.b32.xlu0 %v750, 112
        %v805 = vpop.permute.xlu0 %804
        %v807 = vsel %vm346, %v670, %v753
        %v808 = vsel %vm348, %v807, %v757
        %v809 = vsel %vm350, %v808, %v761
        %v810 = vsel %vm352, %v809, %v765
        %v811 = vsel %vm354, %v810, %v769
        %v812 = vsel %vm356, %v811, %v773
        %v813 = vsel %vm358, %v812, %v777
        %v814 = vsel %vm346, %v726, %v781
        %v815 = vsel %vm348, %v814, %v785
        %v816 = vsel %vm350, %v815, %v789
        %v817 = vsel %vm352, %v816, %v793
        %v818 = vsel %vm354, %v817, %v797
        %v819 = vsel %vm356, %v818, %v801
        %v820 = vsel %vm358, %v819, %v805
        %821 = vst [vmem:[#allocation2 + $0x10] sm:$0xf] %v813
        %822 = vst [vmem:[#allocation2 + $0x18] sm:$0xf] %v820
        %v823 = vld [vmem:[%s168 + $0x1] sm:$0xff]
        %v824 = vld [vmem:[%s168 + $0x9] sm:$0xff]
        %v825 = vld [vmem:[%s168 + $0x19] sm:$0xff]
        %v826 = vld [vmem:[%s168 + $0x21] sm:$0xff]
        %v827 = vld [vmem:[%s168 + $0x31] sm:$0xff]
        %v828 = vld [vmem:[%s168 + $0x39] sm:$0xff]
        %v829 = vld [vmem:[%s168 + $0x49] sm:$0xff]
        %v830 = vld [vmem:[%s168 + $0x51] sm:$0xff]
        %v831 = vrot.slane %v827, 4
        %v832 = vsel %vm178, %v831, %v823
        %v833 = vrot.slane %v823, 4
        %v834 = vsel %vm178, %v827, %v833
        %v836 = vunpack.c.l.s4 1983009808
        %v837 = vunpack.c.0.s8 %v836
        %v838 = vperm.slane %v832, %v837
        %v840 = vunpack.c.l.s4 1983009808
        %v841 = vunpack.c.0.s8 %v840
        %v842 = vperm.slane %v834, %v841
        %v843 = vrot.slane %v829, 4
        %v844 = vsel %vm178, %v843, %v825
        %v845 = vrot.slane %v825, 4
        %v846 = vsel %vm178, %v829, %v845
        %v848 = vunpack.c.l.s4 1983009808
        %v849 = vunpack.c.0.s8 %v848
        %v850 = vperm.slane %v844, %v849
        %v852 = vunpack.c.l.s4 1983009808
        %v853 = vunpack.c.0.s8 %v852
        %v854 = vperm.slane %v846, %v853
        %v855 = vrot.slane %v850, 4
        %v856 = vsel %vm178, %v855, %v838
        %v857 = vrot.slane %v838, 4
        %v858 = vsel %vm178, %v850, %v857
        %v860 = vunpack.c.l.s4 1934713408
        %v861 = vunpack.c.0.s8 %v860
        %v862 = vperm.slane %v856, %v861
        %v864 = vunpack.c.l.s4 1934713408
        %v865 = vunpack.c.0.s8 %v864
        %v866 = vperm.slane %v858, %v865
        %v867 = vrot.slane %v854, 4
        %v868 = vsel %vm178, %v867, %v842
        %v869 = vrot.slane %v842, 4
        %v870 = vsel %vm178, %v854, %v869
        %v872 = vunpack.c.l.s4 1934713408
        %v873 = vunpack.c.0.s8 %v872
        %v874 = vperm.slane %v868, %v873
        %v876 = vunpack.c.l.s4 1934713408
        %v877 = vunpack.c.0.s8 %v876
        %v878 = vperm.slane %v870, %v877
        %v879 = vrot.slane %v862, 4
        %v880 = vsel %vm178, 0.0, %v879
        %v881 = vrot.slane %v866, 4
        %v882 = vsel %vm178, 0.0, %v881
        %v883 = vrot.slane %v874, 4
        %v884 = vsel %vm178, 0.0, %v883
        %v885 = vrot.slane %v878, 4
        %v886 = vsel %vm178, 0.0, %v885
        %v887 = vrot.slane %v828, 4
        %v888 = vsel %vm178, %v887, %v824
        %v889 = vrot.slane %v824, 4
        %v890 = vsel %vm178, %v828, %v889
        %v892 = vunpack.c.l.s4 1983009808
        %v893 = vunpack.c.0.s8 %v892
        %v894 = vperm.slane %v888, %v893
        %v896 = vunpack.c.l.s4 1983009808
        %v897 = vunpack.c.0.s8 %v896
        %v898 = vperm.slane %v890, %v897
        %v899 = vrot.slane %v830, 4
        %v900 = vsel %vm178, %v899, %v826
        %v901 = vrot.slane %v826, 4
        %v902 = vsel %vm178, %v830, %v901
        %v904 = vunpack.c.l.s4 1983009808
        %v905 = vunpack.c.0.s8 %v904
        %v906 = vperm.slane %v900, %v905
        %v908 = vunpack.c.l.s4 1983009808
        %v909 = vunpack.c.0.s8 %v908
        %v910 = vperm.slane %v902, %v909
        %v911 = vrot.slane %v906, 4
        %v912 = vsel %vm178, %v911, %v894
        %v913 = vrot.slane %v894, 4
        %v914 = vsel %vm178, %v906, %v913
        %v916 = vunpack.c.l.s4 1934713408
        %v917 = vunpack.c.0.s8 %v916
        %v918 = vperm.slane %v912, %v917
        %v920 = vunpack.c.l.s4 1934713408
        %v921 = vunpack.c.0.s8 %v920
        %v922 = vperm.slane %v914, %v921
        %v923 = vrot.slane %v910, 4
        %v924 = vsel %vm178, %v923, %v898
        %v925 = vrot.slane %v898, 4
        %v926 = vsel %vm178, %v910, %v925
        %v928 = vunpack.c.l.s4 1934713408
        %v929 = vunpack.c.0.s8 %v928
        %v930 = vperm.slane %v924, %v929
        %v932 = vunpack.c.l.s4 1934713408
        %v933 = vunpack.c.0.s8 %v932
        %v934 = vperm.slane %v926, %v933
        %v935 = vrot.slane %v918, 4
        %v936 = vsel %vm178, 0.0, %v935
        %v937 = vrot.slane %v922, 4
        %v938 = vsel %vm178, 0.0, %v937
        %v939 = vrot.slane %v930, 4
        %v940 = vsel %vm178, 0.0, %v939
        %v941 = vrot.slane %v934, 4
        %v942 = vsel %vm178, 0.0, %v941
        %944 = vrot.lane.b32.xlu0 %v880, 16
        %v945 = vpop.permute.xlu0 %944
        %948 = vrot.lane.b32.xlu0 %v866, 32
        %v949 = vpop.permute.xlu0 %948
        %952 = vrot.lane.b32.xlu0 %v882, 48
        %v953 = vpop.permute.xlu0 %952
        %956 = vrot.lane.b32.xlu0 %v874, 64
        %v957 = vpop.permute.xlu0 %956
        %960 = vrot.lane.b32.xlu0 %v884, 80
        %v961 = vpop.permute.xlu0 %960
        %964 = vrot.lane.b32.xlu0 %v878, 96
        %v965 = vpop.permute.xlu0 %964
        %968 = vrot.lane.b32.xlu0 %v886, 112
        %v969 = vpop.permute.xlu0 %968
        %972 = vrot.lane.b32.xlu0 %v936, 16
        %v973 = vpop.permute.xlu0 %972
        %976 = vrot.lane.b32.xlu0 %v922, 32
        %v977 = vpop.permute.xlu0 %976
        %980 = vrot.lane.b32.xlu0 %v938, 48
        %v981 = vpop.permute.xlu0 %980
        %984 = vrot.lane.b32.xlu0 %v930, 64
        %v985 = vpop.permute.xlu0 %984
        %988 = vrot.lane.b32.xlu0 %v940, 80
        %v989 = vpop.permute.xlu0 %988
        %992 = vrot.lane.b32.xlu0 %v934, 96
        %v993 = vpop.permute.xlu0 %992
        %996 = vrot.lane.b32.xlu0 %v942, 112
        %v997 = vpop.permute.xlu0 %996
        %v999 = vsel %vm346, %v862, %v945
        %v1000 = vsel %vm348, %v999, %v949
        %v1001 = vsel %vm350, %v1000, %v953
        %v1002 = vsel %vm352, %v1001, %v957
        %v1003 = vsel %vm354, %v1002, %v961
        %v1004 = vsel %vm356, %v1003, %v965
        %v1005 = vsel %vm358, %v1004, %v969
        %v1006 = vsel %vm346, %v918, %v973
        %v1007 = vsel %vm348, %v1006, %v977
        %v1008 = vsel %vm350, %v1007, %v981
        %v1009 = vsel %vm352, %v1008, %v985
        %v1010 = vsel %vm354, %v1009, %v989
        %v1011 = vsel %vm356, %v1010, %v993
        %v1012 = vsel %vm358, %v1011, %v997
        %v1015 = vrot.slane %v1005, 4
        %v1016 = vrot.slane %v1012, 4
        %1019 = vst [vmem:[#allocation2 + $0x10] sm:$0xf0] %v1015
        %1020 = vst [vmem:[#allocation2 + $0x18] sm:$0xf0] %v1016
        %v1021 = vld [vmem:[%s168 + $0x1] sm:$0xff]
        %v1022 = vld [vmem:[%s168 + $0x9] sm:$0xff]
        %v1023 = vld [vmem:[%s168 + $0x19] sm:$0xff]
        %v1024 = vld [vmem:[%s168 + $0x21] sm:$0xff]
        %v1025 = vld [vmem:[%s168 + $0x31] sm:$0xff]
        %v1026 = vld [vmem:[%s168 + $0x39] sm:$0xff]
        %v1027 = vld [vmem:[%s168 + $0x49] sm:$0xff]
        %v1028 = vld [vmem:[%s168 + $0x51] sm:$0xff]
        %1037 = vrot.lane.b32.xlu0 %v1021, 127
        %v1038 = vpop.permute.xlu0 %1037
        %1039 = vrot.lane.b32.xlu0 %v1022, 127
        %v1040 = vpop.permute.xlu0 %1039
        %1041 = vrot.lane.b32.xlu0 %v1023, 127
        %v1042 = vpop.permute.xlu0 %1041
        %1043 = vrot.lane.b32.xlu0 %v1024, 127
        %v1044 = vpop.permute.xlu0 %1043
        %1045 = vrot.lane.b32.xlu0 %v1025, 127
        %v1046 = vpop.permute.xlu0 %1045
        %1047 = vrot.lane.b32.xlu0 %v1026, 127
        %v1048 = vpop.permute.xlu0 %1047
        %1049 = vrot.lane.b32.xlu0 %v1027, 127
        %v1050 = vpop.permute.xlu0 %1049
        %1051 = vrot.lane.b32.xlu0 %v1028, 127
        %v1052 = vpop.permute.xlu0 %1051
        %v1061 = vrot.slane %v1046, 4
        %v1062 = vsel %vm178, %v1061, %v1038
        %v1063 = vrot.slane %v1038, 4
        %v1064 = vsel %vm178, %v1046, %v1063
        %v1066 = vunpack.c.l.s4 1983009808
        %v1067 = vunpack.c.0.s8 %v1066
        %v1068 = vperm.slane %v1062, %v1067
        %v1070 = vunpack.c.l.s4 1983009808
        %v1071 = vunpack.c.0.s8 %v1070
        %v1072 = vperm.slane %v1064, %v1071
        %v1073 = vrot.slane %v1050, 4
        %v1074 = vsel %vm178, %v1073, %v1042
        %v1075 = vrot.slane %v1042, 4
        %v1076 = vsel %vm178, %v1050, %v1075
        %v1078 = vunpack.c.l.s4 1983009808
        %v1079 = vunpack.c.0.s8 %v1078
        %v1080 = vperm.slane %v1074, %v1079
        %v1082 = vunpack.c.l.s4 1983009808
        %v1083 = vunpack.c.0.s8 %v1082
        %v1084 = vperm.slane %v1076, %v1083
        %v1085 = vrot.slane %v1080, 4
        %v1086 = vsel %vm178, %v1085, %v1068
        %v1087 = vrot.slane %v1068, 4
        %v1088 = vsel %vm178, %v1080, %v1087
        %v1090 = vunpack.c.l.s4 1934713408
        %v1091 = vunpack.c.0.s8 %v1090
        %v1092 = vperm.slane %v1086, %v1091
        %v1094 = vunpack.c.l.s4 1934713408
        %v1095 = vunpack.c.0.s8 %v1094
        %v1096 = vperm.slane %v1088, %v1095
        %v1097 = vrot.slane %v1084, 4
        %v1098 = vsel %vm178, %v1097, %v1072
        %v1099 = vrot.slane %v1072, 4
        %v1100 = vsel %vm178, %v1084, %v1099
        %v1102 = vunpack.c.l.s4 1934713408
        %v1103 = vunpack.c.0.s8 %v1102
        %v1104 = vperm.slane %v1098, %v1103
        %v1106 = vunpack.c.l.s4 1934713408
        %v1107 = vunpack.c.0.s8 %v1106
        %v1108 = vperm.slane %v1100, %v1107
        %v1109 = vrot.slane %v1092, 4
        %v1110 = vsel %vm178, 0.0, %v1109
        %v1111 = vrot.slane %v1096, 4
        %v1112 = vsel %vm178, 0.0, %v1111
        %v1113 = vrot.slane %v1104, 4
        %v1114 = vsel %vm178, 0.0, %v1113
        %v1115 = vrot.slane %v1108, 4
        %v1116 = vsel %vm178, 0.0, %v1115
        %v1117 = vrot.slane %v1048, 4
        %v1118 = vsel %vm178, %v1117, %v1040
        %v1119 = vrot.slane %v1040, 4
        %v1120 = vsel %vm178, %v1048, %v1119
        %v1122 = vunpack.c.l.s4 1983009808
        %v1123 = vunpack.c.0.s8 %v1122
        %v1124 = vperm.slane %v1118, %v1123
        %v1126 = vunpack.c.l.s4 1983009808
        %v1127 = vunpack.c.0.s8 %v1126
        %v1128 = vperm.slane %v1120, %v1127
        %v1129 = vrot.slane %v1052, 4
        %v1130 = vsel %vm178, %v1129, %v1044
        %v1131 = vrot.slane %v1044, 4
        %v1132 = vsel %vm178, %v1052, %v1131
        %v1134 = vunpack.c.l.s4 1983009808
        %v1135 = vunpack.c.0.s8 %v1134
        %v1136 = vperm.slane %v1130, %v1135
        %v1138 = vunpack.c.l.s4 1983009808
        %v1139 = vunpack.c.0.s8 %v1138
        %v1140 = vperm.slane %v1132, %v1139
        %v1141 = vrot.slane %v1136, 4
        %v1142 = vsel %vm178, %v1141, %v1124
        %v1143 = vrot.slane %v1124, 4
        %v1144 = vsel %vm178, %v1136, %v1143
        %v1146 = vunpack.c.l.s4 1934713408
        %v1147 = vunpack.c.0.s8 %v1146
        %v1148 = vperm.slane %v1142, %v1147
        %v1150 = vunpack.c.l.s4 1934713408
        %v1151 = vunpack.c.0.s8 %v1150
        %v1152 = vperm.slane %v1144, %v1151
        %v1153 = vrot.slane %v1140, 4
        %v1154 = vsel %vm178, %v1153, %v1128
        %v1155 = vrot.slane %v1128, 4
        %v1156 = vsel %vm178, %v1140, %v1155
        %v1158 = vunpack.c.l.s4 1934713408
        %v1159 = vunpack.c.0.s8 %v1158
        %v1160 = vperm.slane %v1154, %v1159
        %v1162 = vunpack.c.l.s4 1934713408
        %v1163 = vunpack.c.0.s8 %v1162
        %v1164 = vperm.slane %v1156, %v1163
        %v1165 = vrot.slane %v1148, 4
        %v1166 = vsel %vm178, 0.0, %v1165
        %v1167 = vrot.slane %v1152, 4
        %v1168 = vsel %vm178, 0.0, %v1167
        %v1169 = vrot.slane %v1160, 4
        %v1170 = vsel %vm178, 0.0, %v1169
        %v1171 = vrot.slane %v1164, 4
        %v1172 = vsel %vm178, 0.0, %v1171
        %1174 = vrot.lane.b32.xlu0 %v1110, 16
        %v1175 = vpop.permute.xlu0 %1174
        %1178 = vrot.lane.b32.xlu0 %v1096, 32
        %v1179 = vpop.permute.xlu0 %1178
        %1182 = vrot.lane.b32.xlu0 %v1112, 48
        %v1183 = vpop.permute.xlu0 %1182
        %1186 = vrot.lane.b32.xlu0 %v1104, 64
        %v1187 = vpop.permute.xlu0 %1186
        %1190 = vrot.lane.b32.xlu0 %v1114, 80
        %v1191 = vpop.permute.xlu0 %1190
        %1194 = vrot.lane.b32.xlu0 %v1108, 96
        %v1195 = vpop.permute.xlu0 %1194
        %1198 = vrot.lane.b32.xlu0 %v1116, 112
        %v1199 = vpop.permute.xlu0 %1198
        %1202 = vrot.lane.b32.xlu0 %v1166, 16
        %v1203 = vpop.permute.xlu0 %1202
        %1206 = vrot.lane.b32.xlu0 %v1152, 32
        %v1207 = vpop.permute.xlu0 %1206
        %1210 = vrot.lane.b32.xlu0 %v1168, 48
        %v1211 = vpop.permute.xlu0 %1210
        %1214 = vrot.lane.b32.xlu0 %v1160, 64
        %v1215 = vpop.permute.xlu0 %1214
        %1218 = vrot.lane.b32.xlu0 %v1170, 80
        %v1219 = vpop.permute.xlu0 %1218
        %1222 = vrot.lane.b32.xlu0 %v1164, 96
        %v1223 = vpop.permute.xlu0 %1222
        %1226 = vrot.lane.b32.xlu0 %v1172, 112
        %v1227 = vpop.permute.xlu0 %1226
        %v1229 = vsel %vm346, %v1092, %v1175
        %v1230 = vsel %vm348, %v1229, %v1179
        %v1231 = vsel %vm350, %v1230, %v1183
        %v1232 = vsel %vm352, %v1231, %v1187
        %v1233 = vsel %vm354, %v1232, %v1191
        %v1234 = vsel %vm356, %v1233, %v1195
        %v1235 = vsel %vm358, %v1234, %v1199
        %v1236 = vsel %vm346, %v1148, %v1203
        %v1237 = vsel %vm348, %v1236, %v1207
        %v1238 = vsel %vm350, %v1237, %v1211
        %v1239 = vsel %vm352, %v1238, %v1215
        %v1240 = vsel %vm354, %v1239, %v1219
        %v1241 = vsel %vm356, %v1240, %v1223
        %v1242 = vsel %vm358, %v1241, %v1227
        %1243 = vst [vmem:[#allocation2 + $0x20] sm:$0xf] %v1235
        %1244 = vst [vmem:[#allocation2 + $0x28] sm:$0xf] %v1242
        %v1245 = vld [vmem:[%s168 + $0x1] sm:$0xff]
        %v1246 = vld [vmem:[%s168 + $0x9] sm:$0xff]
        %v1247 = vld [vmem:[%s168 + $0x19] sm:$0xff]
        %v1248 = vld [vmem:[%s168 + $0x21] sm:$0xff]
        %v1249 = vld [vmem:[%s168 + $0x31] sm:$0xff]
        %v1250 = vld [vmem:[%s168 + $0x39] sm:$0xff]
        %v1251 = vld [vmem:[%s168 + $0x49] sm:$0xff]
        %v1252 = vld [vmem:[%s168 + $0x51] sm:$0xff]
        %1261 = vrot.lane.b32.xlu0 %v1245, 126
        %v1262 = vpop.permute.xlu0 %1261
        %1263 = vrot.lane.b32.xlu0 %v1246, 126
        %v1264 = vpop.permute.xlu0 %1263
        %1265 = vrot.lane.b32.xlu0 %v1247, 126
        %v1266 = vpop.permute.xlu0 %1265
        %1267 = vrot.lane.b32.xlu0 %v1248, 126
        %v1268 = vpop.permute.xlu0 %1267
        %1269 = vrot.lane.b32.xlu0 %v1249, 126
        %v1270 = vpop.permute.xlu0 %1269
        %1271 = vrot.lane.b32.xlu0 %v1250, 126
        %v1272 = vpop.permute.xlu0 %1271
        %1273 = vrot.lane.b32.xlu0 %v1251, 126
        %v1274 = vpop.permute.xlu0 %1273
        %1275 = vrot.lane.b32.xlu0 %v1252, 126
        %v1276 = vpop.permute.xlu0 %1275
        %v1285 = vrot.slane %v1270, 4
        %v1286 = vsel %vm178, %v1285, %v1262
        %v1287 = vrot.slane %v1262, 4
        %v1288 = vsel %vm178, %v1270, %v1287
        %v1290 = vunpack.c.l.s4 1983009808
        %v1291 = vunpack.c.0.s8 %v1290
        %v1292 = vperm.slane %v1286, %v1291
        %v1294 = vunpack.c.l.s4 1983009808
        %v1295 = vunpack.c.0.s8 %v1294
        %v1296 = vperm.slane %v1288, %v1295
        %v1297 = vrot.slane %v1274, 4
        %v1298 = vsel %vm178, %v1297, %v1266
        %v1299 = vrot.slane %v1266, 4
        %v1300 = vsel %vm178, %v1274, %v1299
        %v1302 = vunpack.c.l.s4 1983009808
        %v1303 = vunpack.c.0.s8 %v1302
        %v1304 = vperm.slane %v1298, %v1303
        %v1306 = vunpack.c.l.s4 1983009808
        %v1307 = vunpack.c.0.s8 %v1306
        %v1308 = vperm.slane %v1300, %v1307
        %v1309 = vrot.slane %v1304, 4
        %v1310 = vsel %vm178, %v1309, %v1292
        %v1311 = vrot.slane %v1292, 4
        %v1312 = vsel %vm178, %v1304, %v1311
        %v1314 = vunpack.c.l.s4 1934713408
        %v1315 = vunpack.c.0.s8 %v1314
        %v1316 = vperm.slane %v1310, %v1315
        %v1318 = vunpack.c.l.s4 1934713408
        %v1319 = vunpack.c.0.s8 %v1318
        %v1320 = vperm.slane %v1312, %v1319
        %v1321 = vrot.slane %v1308, 4
        %v1322 = vsel %vm178, %v1321, %v1296
        %v1323 = vrot.slane %v1296, 4
        %v1324 = vsel %vm178, %v1308, %v1323
        %v1326 = vunpack.c.l.s4 1934713408
        %v1327 = vunpack.c.0.s8 %v1326
        %v1328 = vperm.slane %v1322, %v1327
        %v1330 = vunpack.c.l.s4 1934713408
        %v1331 = vunpack.c.0.s8 %v1330
        %v1332 = vperm.slane %v1324, %v1331
        %v1333 = vrot.slane %v1316, 4
        %v1334 = vsel %vm178, 0.0, %v1333
        %v1335 = vrot.slane %v1320, 4
        %v1336 = vsel %vm178, 0.0, %v1335
        %v1337 = vrot.slane %v1328, 4
        %v1338 = vsel %vm178, 0.0, %v1337
        %v1339 = vrot.slane %v1332, 4
        %v1340 = vsel %vm178, 0.0, %v1339
        %v1341 = vrot.slane %v1272, 4
        %v1342 = vsel %vm178, %v1341, %v1264
        %v1343 = vrot.slane %v1264, 4
        %v1344 = vsel %vm178, %v1272, %v1343
        %v1346 = vunpack.c.l.s4 1983009808
        %v1347 = vunpack.c.0.s8 %v1346
        %v1348 = vperm.slane %v1342, %v1347
        %v1350 = vunpack.c.l.s4 1983009808
        %v1351 = vunpack.c.0.s8 %v1350
        %v1352 = vperm.slane %v1344, %v1351
        %v1353 = vrot.slane %v1276, 4
        %v1354 = vsel %vm178, %v1353, %v1268
        %v1355 = vrot.slane %v1268, 4
        %v1356 = vsel %vm178, %v1276, %v1355
        %v1358 = vunpack.c.l.s4 1983009808
        %v1359 = vunpack.c.0.s8 %v1358
        %v1360 = vperm.slane %v1354, %v1359
        %v1362 = vunpack.c.l.s4 1983009808
        %v1363 = vunpack.c.0.s8 %v1362
        %v1364 = vperm.slane %v1356, %v1363
        %v1365 = vrot.slane %v1360, 4
        %v1366 = vsel %vm178, %v1365, %v1348
        %v1367 = vrot.slane %v1348, 4
        %v1368 = vsel %vm178, %v1360, %v1367
        %v1370 = vunpack.c.l.s4 1934713408
        %v1371 = vunpack.c.0.s8 %v1370
        %v1372 = vperm.slane %v1366, %v1371
        %v1374 = vunpack.c.l.s4 1934713408
        %v1375 = vunpack.c.0.s8 %v1374
        %v1376 = vperm.slane %v1368, %v1375
        %v1377 = vrot.slane %v1364, 4
        %v1378 = vsel %vm178, %v1377, %v1352
        %v1379 = vrot.slane %v1352, 4
        %v1380 = vsel %vm178, %v1364, %v1379
        %v1382 = vunpack.c.l.s4 1934713408
        %v1383 = vunpack.c.0.s8 %v1382
        %v1384 = vperm.slane %v1378, %v1383
        %v1386 = vunpack.c.l.s4 1934713408
        %v1387 = vunpack.c.0.s8 %v1386
        %v1388 = vperm.slane %v1380, %v1387
        %v1389 = vrot.slane %v1372, 4
        %v1390 = vsel %vm178, 0.0, %v1389
        %v1391 = vrot.slane %v1376, 4
        %v1392 = vsel %vm178, 0.0, %v1391
        %v1393 = vrot.slane %v1384, 4
        %v1394 = vsel %vm178, 0.0, %v1393
        %v1395 = vrot.slane %v1388, 4
        %v1396 = vsel %vm178, 0.0, %v1395
        %1398 = vrot.lane.b32.xlu0 %v1334, 16
        %v1399 = vpop.permute.xlu0 %1398
        %1402 = vrot.lane.b32.xlu0 %v1320, 32
        %v1403 = vpop.permute.xlu0 %1402
        %1406 = vrot.lane.b32.xlu0 %v1336, 48
        %v1407 = vpop.permute.xlu0 %1406
        %1410 = vrot.lane.b32.xlu0 %v1328, 64
        %v1411 = vpop.permute.xlu0 %1410
        %1414 = vrot.lane.b32.xlu0 %v1338, 80
        %v1415 = vpop.permute.xlu0 %1414
        %1418 = vrot.lane.b32.xlu0 %v1332, 96
        %v1419 = vpop.permute.xlu0 %1418
        %1422 = vrot.lane.b32.xlu0 %v1340, 112
        %v1423 = vpop.permute.xlu0 %1422
        %1426 = vrot.lane.b32.xlu0 %v1390, 16
        %v1427 = vpop.permute.xlu0 %1426
        %1430 = vrot.lane.b32.xlu0 %v1376, 32
        %v1431 = vpop.permute.xlu0 %1430
        %1434 = vrot.lane.b32.xlu0 %v1392, 48
        %v1435 = vpop.permute.xlu0 %1434
        %1438 = vrot.lane.b32.xlu0 %v1384, 64
        %v1439 = vpop.permute.xlu0 %1438
        %1442 = vrot.lane.b32.xlu0 %v1394, 80
        %v1443 = vpop.permute.xlu0 %1442
        %1446 = vrot.lane.b32.xlu0 %v1388, 96
        %v1447 = vpop.permute.xlu0 %1446
        %1450 = vrot.lane.b32.xlu0 %v1396, 112
        %v1451 = vpop.permute.xlu0 %1450
        %v1453 = vsel %vm346, %v1316, %v1399
        %v1454 = vsel %vm348, %v1453, %v1403
        %v1455 = vsel %vm350, %v1454, %v1407
        %v1456 = vsel %vm352, %v1455, %v1411
        %v1457 = vsel %vm354, %v1456, %v1415
        %v1458 = vsel %vm356, %v1457, %v1419
        %v1459 = vsel %vm358, %v1458, %v1423
        %v1460 = vsel %vm346, %v1372, %v1427
        %v1461 = vsel %vm348, %v1460, %v1431
        %v1462 = vsel %vm350, %v1461, %v1435
        %v1463 = vsel %vm352, %v1462, %v1439
        %v1464 = vsel %vm354, %v1463, %v1443
        %v1465 = vsel %vm356, %v1464, %v1447
        %v1466 = vsel %vm358, %v1465, %v1451
        %v1469 = vrot.slane %v1459, 4
        %v1470 = vrot.slane %v1466, 4
        %1473 = vst [vmem:[#allocation2 + $0x20] sm:$0xf0] %v1469
        %1474 = vst [vmem:[#allocation2 + $0x28] sm:$0xf0] %v1470
        %v1475 = vld [vmem:[%s168 + $0x2] sm:$0xff]
        %v1476 = vld [vmem:[%s168 + $0xa] sm:$0xff]
        %v1477 = vld [vmem:[%s168 + $0x1a] sm:$0xff]
        %v1478 = vld [vmem:[%s168 + $0x22] sm:$0xff]
        %v1479 = vld [vmem:[%s168 + $0x32] sm:$0xff]
        %v1480 = vld [vmem:[%s168 + $0x3a] sm:$0xff]
        %v1481 = vld [vmem:[%s168 + $0x4a] sm:$0xff]
        %v1482 = vld [vmem:[%s168 + $0x52] sm:$0xff]
        %v1483 = vrot.slane %v1479, 4
        %v1484 = vsel %vm178, %v1483, %v1475
        %v1485 = vrot.slane %v1475, 4
        %v1486 = vsel %vm178, %v1479, %v1485
        %v1488 = vunpack.c.l.s4 1983009808
        %v1489 = vunpack.c.0.s8 %v1488
        %v1490 = vperm.slane %v1484, %v1489
        %v1492 = vunpack.c.l.s4 1983009808
        %v1493 = vunpack.c.0.s8 %v1492
        %v1494 = vperm.slane %v1486, %v1493
        %v1495 = vrot.slane %v1481, 4
        %v1496 = vsel %vm178, %v1495, %v1477
        %v1497 = vrot.slane %v1477, 4
        %v1498 = vsel %vm178, %v1481, %v1497
        %v1500 = vunpack.c.l.s4 1983009808
        %v1501 = vunpack.c.0.s8 %v1500
        %v1502 = vperm.slane %v1496, %v1501
        %v1504 = vunpack.c.l.s4 1983009808
        %v1505 = vunpack.c.0.s8 %v1504
        %v1506 = vperm.slane %v1498, %v1505
        %v1507 = vrot.slane %v1502, 4
        %v1508 = vsel %vm178, %v1507, %v1490
        %v1509 = vrot.slane %v1490, 4
        %v1510 = vsel %vm178, %v1502, %v1509
        %v1512 = vunpack.c.l.s4 1934713408
        %v1513 = vunpack.c.0.s8 %v1512
        %v1514 = vperm.slane %v1508, %v1513
        %v1516 = vunpack.c.l.s4 1934713408
        %v1517 = vunpack.c.0.s8 %v1516
        %v1518 = vperm.slane %v1510, %v1517
        %v1519 = vrot.slane %v1506, 4
        %v1520 = vsel %vm178, %v1519, %v1494
        %v1521 = vrot.slane %v1494, 4
        %v1522 = vsel %vm178, %v1506, %v1521
        %v1524 = vunpack.c.l.s4 1934713408
        %v1525 = vunpack.c.0.s8 %v1524
        %v1526 = vperm.slane %v1520, %v1525
        %v1528 = vunpack.c.l.s4 1934713408
        %v1529 = vunpack.c.0.s8 %v1528
        %v1530 = vperm.slane %v1522, %v1529
        %v1531 = vrot.slane %v1514, 4
        %v1532 = vsel %vm178, 0.0, %v1531
        %v1533 = vrot.slane %v1518, 4
        %v1534 = vsel %vm178, 0.0, %v1533
        %v1535 = vrot.slane %v1526, 4
        %v1536 = vsel %vm178, 0.0, %v1535
        %v1537 = vrot.slane %v1530, 4
        %v1538 = vsel %vm178, 0.0, %v1537
        %v1539 = vrot.slane %v1480, 4
        %v1540 = vsel %vm178, %v1539, %v1476
        %v1541 = vrot.slane %v1476, 4
        %v1542 = vsel %vm178, %v1480, %v1541
        %v1544 = vunpack.c.l.s4 1983009808
        %v1545 = vunpack.c.0.s8 %v1544
        %v1546 = vperm.slane %v1540, %v1545
        %v1548 = vunpack.c.l.s4 1983009808
        %v1549 = vunpack.c.0.s8 %v1548
        %v1550 = vperm.slane %v1542, %v1549
        %v1551 = vrot.slane %v1482, 4
        %v1552 = vsel %vm178, %v1551, %v1478
        %v1553 = vrot.slane %v1478, 4
        %v1554 = vsel %vm178, %v1482, %v1553
        %v1556 = vunpack.c.l.s4 1983009808
        %v1557 = vunpack.c.0.s8 %v1556
        %v1558 = vperm.slane %v1552, %v1557
        %v1560 = vunpack.c.l.s4 1983009808
        %v1561 = vunpack.c.0.s8 %v1560
        %v1562 = vperm.slane %v1554, %v1561
        %v1563 = vrot.slane %v1558, 4
        %v1564 = vsel %vm178, %v1563, %v1546
        %v1565 = vrot.slane %v1546, 4
        %v1566 = vsel %vm178, %v1558, %v1565
        %v1568 = vunpack.c.l.s4 1934713408
        %v1569 = vunpack.c.0.s8 %v1568
        %v1570 = vperm.slane %v1564, %v1569
        %v1572 = vunpack.c.l.s4 1934713408
        %v1573 = vunpack.c.0.s8 %v1572
        %v1574 = vperm.slane %v1566, %v1573
        %v1575 = vrot.slane %v1562, 4
        %v1576 = vsel %vm178, %v1575, %v1550
        %v1577 = vrot.slane %v1550, 4
        %v1578 = vsel %vm178, %v1562, %v1577
        %v1580 = vunpack.c.l.s4 1934713408
        %v1581 = vunpack.c.0.s8 %v1580
        %v1582 = vperm.slane %v1576, %v1581
        %v1584 = vunpack.c.l.s4 1934713408
        %v1585 = vunpack.c.0.s8 %v1584
        %v1586 = vperm.slane %v1578, %v1585
        %v1587 = vrot.slane %v1570, 4
        %v1588 = vsel %vm178, 0.0, %v1587
        %v1589 = vrot.slane %v1574, 4
        %v1590 = vsel %vm178, 0.0, %v1589
        %v1591 = vrot.slane %v1582, 4
        %v1592 = vsel %vm178, 0.0, %v1591
        %v1593 = vrot.slane %v1586, 4
        %v1594 = vsel %vm178, 0.0, %v1593
        %1596 = vrot.lane.b32.xlu0 %v1532, 16
        %v1597 = vpop.permute.xlu0 %1596
        %1600 = vrot.lane.b32.xlu0 %v1518, 32
        %v1601 = vpop.permute.xlu0 %1600
        %1604 = vrot.lane.b32.xlu0 %v1534, 48
        %v1605 = vpop.permute.xlu0 %1604
        %1608 = vrot.lane.b32.xlu0 %v1526, 64
        %v1609 = vpop.permute.xlu0 %1608
        %1612 = vrot.lane.b32.xlu0 %v1536, 80
        %v1613 = vpop.permute.xlu0 %1612
        %1616 = vrot.lane.b32.xlu0 %v1530, 96
        %v1617 = vpop.permute.xlu0 %1616
        %1620 = vrot.lane.b32.xlu0 %v1538, 112
        %v1621 = vpop.permute.xlu0 %1620
        %1624 = vrot.lane.b32.xlu0 %v1588, 16
        %v1625 = vpop.permute.xlu0 %1624
        %1628 = vrot.lane.b32.xlu0 %v1574, 32
        %v1629 = vpop.permute.xlu0 %1628
        %1632 = vrot.lane.b32.xlu0 %v1590, 48
        %v1633 = vpop.permute.xlu0 %1632
        %1636 = vrot.lane.b32.xlu0 %v1582, 64
        %v1637 = vpop.permute.xlu0 %1636
        %1640 = vrot.lane.b32.xlu0 %v1592, 80
        %v1641 = vpop.permute.xlu0 %1640
        %1644 = vrot.lane.b32.xlu0 %v1586, 96
        %v1645 = vpop.permute.xlu0 %1644
        %1648 = vrot.lane.b32.xlu0 %v1594, 112
        %v1649 = vpop.permute.xlu0 %1648
        %v1651 = vsel %vm346, %v1514, %v1597
        %v1652 = vsel %vm348, %v1651, %v1601
        %v1653 = vsel %vm350, %v1652, %v1605
        %v1654 = vsel %vm352, %v1653, %v1609
        %v1655 = vsel %vm354, %v1654, %v1613
        %v1656 = vsel %vm356, %v1655, %v1617
        %v1657 = vsel %vm358, %v1656, %v1621
        %v1658 = vsel %vm346, %v1570, %v1625
        %v1659 = vsel %vm348, %v1658, %v1629
        %v1660 = vsel %vm350, %v1659, %v1633
        %v1661 = vsel %vm352, %v1660, %v1637
        %v1662 = vsel %vm354, %v1661, %v1641
        %v1663 = vsel %vm356, %v1662, %v1645
        %v1664 = vsel %vm358, %v1663, %v1649
        %1665 = vst [vmem:[#allocation2 + $0x30] sm:$0xf] %v1657
        %1666 = vst [vmem:[#allocation2 + $0x38] sm:$0xf] %v1664
        %v1667 = vld [vmem:[%s168 + $0x2] sm:$0xff]
        %v1668 = vld [vmem:[%s168 + $0xa] sm:$0xff]
        %v1669 = vld [vmem:[%s168 + $0x1a] sm:$0xff]
        %v1670 = vld [vmem:[%s168 + $0x22] sm:$0xff]
        %v1671 = vld [vmem:[%s168 + $0x32] sm:$0xff]
        %v1672 = vld [vmem:[%s168 + $0x3a] sm:$0xff]
        %v1673 = vld [vmem:[%s168 + $0x4a] sm:$0xff]
        %v1674 = vld [vmem:[%s168 + $0x52] sm:$0xff]
        %1683 = vrot.lane.b32.xlu0 %v1667, 127
        %v1684 = vpop.permute.xlu0 %1683
        %1685 = vrot.lane.b32.xlu0 %v1668, 127
        %v1686 = vpop.permute.xlu0 %1685
        %1687 = vrot.lane.b32.xlu0 %v1669, 127
        %v1688 = vpop.permute.xlu0 %1687
        %1689 = vrot.lane.b32.xlu0 %v1670, 127
        %v1690 = vpop.permute.xlu0 %1689
        %1691 = vrot.lane.b32.xlu0 %v1671, 127
        %v1692 = vpop.permute.xlu0 %1691
        %1693 = vrot.lane.b32.xlu0 %v1672, 127
        %v1694 = vpop.permute.xlu0 %1693
        %1695 = vrot.lane.b32.xlu0 %v1673, 127
        %v1696 = vpop.permute.xlu0 %1695
        %1697 = vrot.lane.b32.xlu0 %v1674, 127
        %v1698 = vpop.permute.xlu0 %1697
        %v1707 = vrot.slane %v1692, 4
        %v1708 = vsel %vm178, %v1707, %v1684
        %v1709 = vrot.slane %v1684, 4
        %v1710 = vsel %vm178, %v1692, %v1709
        %v1712 = vunpack.c.l.s4 1983009808
        %v1713 = vunpack.c.0.s8 %v1712
        %v1714 = vperm.slane %v1708, %v1713
        %v1716 = vunpack.c.l.s4 1983009808
        %v1717 = vunpack.c.0.s8 %v1716
        %v1718 = vperm.slane %v1710, %v1717
        %v1719 = vrot.slane %v1696, 4
        %v1720 = vsel %vm178, %v1719, %v1688
        %v1721 = vrot.slane %v1688, 4
        %v1722 = vsel %vm178, %v1696, %v1721
        %v1724 = vunpack.c.l.s4 1983009808
        %v1725 = vunpack.c.0.s8 %v1724
        %v1726 = vperm.slane %v1720, %v1725
        %v1728 = vunpack.c.l.s4 1983009808
        %v1729 = vunpack.c.0.s8 %v1728
        %v1730 = vperm.slane %v1722, %v1729
        %v1731 = vrot.slane %v1726, 4
        %v1732 = vsel %vm178, %v1731, %v1714
        %v1733 = vrot.slane %v1714, 4
        %v1734 = vsel %vm178, %v1726, %v1733
        %v1736 = vunpack.c.l.s4 1934713408
        %v1737 = vunpack.c.0.s8 %v1736
        %v1738 = vperm.slane %v1732, %v1737
        %v1740 = vunpack.c.l.s4 1934713408
        %v1741 = vunpack.c.0.s8 %v1740
        %v1742 = vperm.slane %v1734, %v1741
        %v1743 = vrot.slane %v1730, 4
        %v1744 = vsel %vm178, %v1743, %v1718
        %v1745 = vrot.slane %v1718, 4
        %v1746 = vsel %vm178, %v1730, %v1745
        %v1748 = vunpack.c.l.s4 1934713408
        %v1749 = vunpack.c.0.s8 %v1748
        %v1750 = vperm.slane %v1744, %v1749
        %v1752 = vunpack.c.l.s4 1934713408
        %v1753 = vunpack.c.0.s8 %v1752
        %v1754 = vperm.slane %v1746, %v1753
        %v1755 = vrot.slane %v1738, 4
        %v1756 = vsel %vm178, 0.0, %v1755
        %v1757 = vrot.slane %v1742, 4
        %v1758 = vsel %vm178, 0.0, %v1757
        %v1759 = vrot.slane %v1750, 4
        %v1760 = vsel %vm178, 0.0, %v1759
        %v1761 = vrot.slane %v1754, 4
        %v1762 = vsel %vm178, 0.0, %v1761
        %v1763 = vrot.slane %v1694, 4
        %v1764 = vsel %vm178, %v1763, %v1686
        %v1765 = vrot.slane %v1686, 4
        %v1766 = vsel %vm178, %v1694, %v1765
        %v1768 = vunpack.c.l.s4 1983009808
        %v1769 = vunpack.c.0.s8 %v1768
        %v1770 = vperm.slane %v1764, %v1769
        %v1772 = vunpack.c.l.s4 1983009808
        %v1773 = vunpack.c.0.s8 %v1772
        %v1774 = vperm.slane %v1766, %v1773
        %v1775 = vrot.slane %v1698, 4
        %v1776 = vsel %vm178, %v1775, %v1690
        %v1777 = vrot.slane %v1690, 4
        %v1778 = vsel %vm178, %v1698, %v1777
        %v1780 = vunpack.c.l.s4 1983009808
        %v1781 = vunpack.c.0.s8 %v1780
        %v1782 = vperm.slane %v1776, %v1781
        %v1784 = vunpack.c.l.s4 1983009808
        %v1785 = vunpack.c.0.s8 %v1784
        %v1786 = vperm.slane %v1778, %v1785
        %v1787 = vrot.slane %v1782, 4
        %v1788 = vsel %vm178, %v1787, %v1770
        %v1789 = vrot.slane %v1770, 4
        %v1790 = vsel %vm178, %v1782, %v1789
        %v1792 = vunpack.c.l.s4 1934713408
        %v1793 = vunpack.c.0.s8 %v1792
        %v1794 = vperm.slane %v1788, %v1793
        %v1796 = vunpack.c.l.s4 1934713408
        %v1797 = vunpack.c.0.s8 %v1796
        %v1798 = vperm.slane %v1790, %v1797
        %v1799 = vrot.slane %v1786, 4
        %v1800 = vsel %vm178, %v1799, %v1774
        %v1801 = vrot.slane %v1774, 4
        %v1802 = vsel %vm178, %v1786, %v1801
        %v1804 = vunpack.c.l.s4 1934713408
        %v1805 = vunpack.c.0.s8 %v1804
        %v1806 = vperm.slane %v1800, %v1805
        %v1808 = vunpack.c.l.s4 1934713408
        %v1809 = vunpack.c.0.s8 %v1808
        %v1810 = vperm.slane %v1802, %v1809
        %v1811 = vrot.slane %v1794, 4
        %v1812 = vsel %vm178, 0.0, %v1811
        %v1813 = vrot.slane %v1798, 4
        %v1814 = vsel %vm178, 0.0, %v1813
        %v1815 = vrot.slane %v1806, 4
        %v1816 = vsel %vm178, 0.0, %v1815
        %v1817 = vrot.slane %v1810, 4
        %v1818 = vsel %vm178, 0.0, %v1817
        %1820 = vrot.lane.b32.xlu0 %v1756, 16
        %v1821 = vpop.permute.xlu0 %1820
        %1824 = vrot.lane.b32.xlu0 %v1742, 32
        %v1825 = vpop.permute.xlu0 %1824
        %1828 = vrot.lane.b32.xlu0 %v1758, 48
        %v1829 = vpop.permute.xlu0 %1828
        %1832 = vrot.lane.b32.xlu0 %v1750, 64
        %v1833 = vpop.permute.xlu0 %1832
        %1836 = vrot.lane.b32.xlu0 %v1760, 80
        %v1837 = vpop.permute.xlu0 %1836
        %1840 = vrot.lane.b32.xlu0 %v1754, 96
        %v1841 = vpop.permute.xlu0 %1840
        %1844 = vrot.lane.b32.xlu0 %v1762, 112
        %v1845 = vpop.permute.xlu0 %1844
        %1848 = vrot.lane.b32.xlu0 %v1812, 16
        %v1849 = vpop.permute.xlu0 %1848
        %1852 = vrot.lane.b32.xlu0 %v1798, 32
        %v1853 = vpop.permute.xlu0 %1852
        %1856 = vrot.lane.b32.xlu0 %v1814, 48
        %v1857 = vpop.permute.xlu0 %1856
        %1860 = vrot.lane.b32.xlu0 %v1806, 64
        %v1861 = vpop.permute.xlu0 %1860
        %1864 = vrot.lane.b32.xlu0 %v1816, 80
        %v1865 = vpop.permute.xlu0 %1864
        %1868 = vrot.lane.b32.xlu0 %v1810, 96
        %v1869 = vpop.permute.xlu0 %1868
        %1872 = vrot.lane.b32.xlu0 %v1818, 112
        %v1873 = vpop.permute.xlu0 %1872
        %v1875 = vsel %vm346, %v1738, %v1821
        %v1876 = vsel %vm348, %v1875, %v1825
        %v1877 = vsel %vm350, %v1876, %v1829
        %v1878 = vsel %vm352, %v1877, %v1833
        %v1879 = vsel %vm354, %v1878, %v1837
        %v1880 = vsel %vm356, %v1879, %v1841
        %v1881 = vsel %vm358, %v1880, %v1845
        %v1882 = vsel %vm346, %v1794, %v1849
        %v1883 = vsel %vm348, %v1882, %v1853
        %v1884 = vsel %vm350, %v1883, %v1857
        %v1885 = vsel %vm352, %v1884, %v1861
        %v1886 = vsel %vm354, %v1885, %v1865
        %v1887 = vsel %vm356, %v1886, %v1869
        %v1888 = vsel %vm358, %v1887, %v1873
        %v1891 = vrot.slane %v1881, 4
        %v1892 = vrot.slane %v1888, 4
        %1895 = vst [vmem:[#allocation2 + $0x30] sm:$0xf0] %v1891
        %1896 = vst [vmem:[#allocation2 + $0x38] sm:$0xf0] %v1892
        %v1897 = vld [vmem:[%s168 + $0x2] sm:$0xff]
        %v1898 = vld [vmem:[%s168 + $0xa] sm:$0xff]
        %v1899 = vld [vmem:[%s168 + $0x1a] sm:$0xff]
        %v1900 = vld [vmem:[%s168 + $0x22] sm:$0xff]
        %v1901 = vld [vmem:[%s168 + $0x32] sm:$0xff]
        %v1902 = vld [vmem:[%s168 + $0x3a] sm:$0xff]
        %v1903 = vld [vmem:[%s168 + $0x4a] sm:$0xff]
        %v1904 = vld [vmem:[%s168 + $0x52] sm:$0xff]
        %1913 = vrot.lane.b32.xlu0 %v1897, 126
        %v1914 = vpop.permute.xlu0 %1913
        %1915 = vrot.lane.b32.xlu0 %v1898, 126
        %v1916 = vpop.permute.xlu0 %1915
        %1917 = vrot.lane.b32.xlu0 %v1899, 126
        %v1918 = vpop.permute.xlu0 %1917
        %1919 = vrot.lane.b32.xlu0 %v1900, 126
        %v1920 = vpop.permute.xlu0 %1919
        %1921 = vrot.lane.b32.xlu0 %v1901, 126
        %v1922 = vpop.permute.xlu0 %1921
        %1923 = vrot.lane.b32.xlu0 %v1902, 126
        %v1924 = vpop.permute.xlu0 %1923
        %1925 = vrot.lane.b32.xlu0 %v1903, 126
        %v1926 = vpop.permute.xlu0 %1925
        %1927 = vrot.lane.b32.xlu0 %v1904, 126
        %v1928 = vpop.permute.xlu0 %1927
        %v1937 = vrot.slane %v1922, 4
        %v1938 = vsel %vm178, %v1937, %v1914
        %v1939 = vrot.slane %v1914, 4
        %v1940 = vsel %vm178, %v1922, %v1939
        %v1942 = vunpack.c.l.s4 1983009808
        %v1943 = vunpack.c.0.s8 %v1942
        %v1944 = vperm.slane %v1938, %v1943
        %v1946 = vunpack.c.l.s4 1983009808
        %v1947 = vunpack.c.0.s8 %v1946
        %v1948 = vperm.slane %v1940, %v1947
        %v1949 = vrot.slane %v1926, 4
        %v1950 = vsel %vm178, %v1949, %v1918
        %v1951 = vrot.slane %v1918, 4
        %v1952 = vsel %vm178, %v1926, %v1951
        %v1954 = vunpack.c.l.s4 1983009808
        %v1955 = vunpack.c.0.s8 %v1954
        %v1956 = vperm.slane %v1950, %v1955
        %v1958 = vunpack.c.l.s4 1983009808
        %v1959 = vunpack.c.0.s8 %v1958
        %v1960 = vperm.slane %v1952, %v1959
        %v1961 = vrot.slane %v1956, 4
        %v1962 = vsel %vm178, %v1961, %v1944
        %v1963 = vrot.slane %v1944, 4
        %v1964 = vsel %vm178, %v1956, %v1963
        %v1966 = vunpack.c.l.s4 1934713408
        %v1967 = vunpack.c.0.s8 %v1966
        %v1968 = vperm.slane %v1962, %v1967
        %v1970 = vunpack.c.l.s4 1934713408
        %v1971 = vunpack.c.0.s8 %v1970
        %v1972 = vperm.slane %v1964, %v1971
        %v1973 = vrot.slane %v1960, 4
        %v1974 = vsel %vm178, %v1973, %v1948
        %v1975 = vrot.slane %v1948, 4
        %v1976 = vsel %vm178, %v1960, %v1975
        %v1978 = vunpack.c.l.s4 1934713408
        %v1979 = vunpack.c.0.s8 %v1978
        %v1980 = vperm.slane %v1974, %v1979
        %v1982 = vunpack.c.l.s4 1934713408
        %v1983 = vunpack.c.0.s8 %v1982
        %v1984 = vperm.slane %v1976, %v1983
        %v1985 = vrot.slane %v1968, 4
        %v1986 = vsel %vm178, 0.0, %v1985
        %v1987 = vrot.slane %v1972, 4
        %v1988 = vsel %vm178, 0.0, %v1987
        %v1989 = vrot.slane %v1980, 4
        %v1990 = vsel %vm178, 0.0, %v1989
        %v1991 = vrot.slane %v1984, 4
        %v1992 = vsel %vm178, 0.0, %v1991
        %v1993 = vrot.slane %v1924, 4
        %v1994 = vsel %vm178, %v1993, %v1916
        %v1995 = vrot.slane %v1916, 4
        %v1996 = vsel %vm178, %v1924, %v1995
        %v1998 = vunpack.c.l.s4 1983009808
        %v1999 = vunpack.c.0.s8 %v1998
        %v2000 = vperm.slane %v1994, %v1999
        %v2002 = vunpack.c.l.s4 1983009808
        %v2003 = vunpack.c.0.s8 %v2002
        %v2004 = vperm.slane %v1996, %v2003
        %v2005 = vrot.slane %v1928, 4
        %v2006 = vsel %vm178, %v2005, %v1920
        %v2007 = vrot.slane %v1920, 4
        %v2008 = vsel %vm178, %v1928, %v2007
        %v2010 = vunpack.c.l.s4 1983009808
        %v2011 = vunpack.c.0.s8 %v2010
        %v2012 = vperm.slane %v2006, %v2011
        %v2014 = vunpack.c.l.s4 1983009808
        %v2015 = vunpack.c.0.s8 %v2014
        %v2016 = vperm.slane %v2008, %v2015
        %v2017 = vrot.slane %v2012, 4
        %v2018 = vsel %vm178, %v2017, %v2000
        %v2019 = vrot.slane %v2000, 4
        %v2020 = vsel %vm178, %v2012, %v2019
        %v2022 = vunpack.c.l.s4 1934713408
        %v2023 = vunpack.c.0.s8 %v2022
        %v2024 = vperm.slane %v2018, %v2023
        %v2026 = vunpack.c.l.s4 1934713408
        %v2027 = vunpack.c.0.s8 %v2026
        %v2028 = vperm.slane %v2020, %v2027
        %v2029 = vrot.slane %v2016, 4
        %v2030 = vsel %vm178, %v2029, %v2004
        %v2031 = vrot.slane %v2004, 4
        %v2032 = vsel %vm178, %v2016, %v2031
        %v2034 = vunpack.c.l.s4 1934713408
        %v2035 = vunpack.c.0.s8 %v2034
        %v2036 = vperm.slane %v2030, %v2035
        %v2038 = vunpack.c.l.s4 1934713408
        %v2039 = vunpack.c.0.s8 %v2038
        %v2040 = vperm.slane %v2032, %v2039
        %v2041 = vrot.slane %v2024, 4
        %v2042 = vsel %vm178, 0.0, %v2041
        %v2043 = vrot.slane %v2028, 4
        %v2044 = vsel %vm178, 0.0, %v2043
        %v2045 = vrot.slane %v2036, 4
        %v2046 = vsel %vm178, 0.0, %v2045
        %v2047 = vrot.slane %v2040, 4
        %v2048 = vsel %vm178, 0.0, %v2047
        %2050 = vrot.lane.b32.xlu0 %v1986, 16
        %v2051 = vpop.permute.xlu0 %2050
        %2054 = vrot.lane.b32.xlu0 %v1972, 32
        %v2055 = vpop.permute.xlu0 %2054
        %2058 = vrot.lane.b32.xlu0 %v1988, 48
        %v2059 = vpop.permute.xlu0 %2058
        %2062 = vrot.lane.b32.xlu0 %v1980, 64
        %v2063 = vpop.permute.xlu0 %2062
        %2066 = vrot.lane.b32.xlu0 %v1990, 80
        %v2067 = vpop.permute.xlu0 %2066
        %2070 = vrot.lane.b32.xlu0 %v1984, 96
        %v2071 = vpop.permute.xlu0 %2070
        %2074 = vrot.lane.b32.xlu0 %v1992, 112
        %v2075 = vpop.permute.xlu0 %2074
        %2078 = vrot.lane.b32.xlu0 %v2042, 16
        %v2079 = vpop.permute.xlu0 %2078
        %2082 = vrot.lane.b32.xlu0 %v2028, 32
        %v2083 = vpop.permute.xlu0 %2082
        %2086 = vrot.lane.b32.xlu0 %v2044, 48
        %v2087 = vpop.permute.xlu0 %2086
        %2090 = vrot.lane.b32.xlu0 %v2036, 64
        %v2091 = vpop.permute.xlu0 %2090
        %2094 = vrot.lane.b32.xlu0 %v2046, 80
        %v2095 = vpop.permute.xlu0 %2094
        %2098 = vrot.lane.b32.xlu0 %v2040, 96
        %v2099 = vpop.permute.xlu0 %2098
        %2102 = vrot.lane.b32.xlu0 %v2048, 112
        %v2103 = vpop.permute.xlu0 %2102
        %v2105 = vsel %vm346, %v1968, %v2051
        %v2106 = vsel %vm348, %v2105, %v2055
        %v2107 = vsel %vm350, %v2106, %v2059
        %v2108 = vsel %vm352, %v2107, %v2063
        %v2109 = vsel %vm354, %v2108, %v2067
        %v2110 = vsel %vm356, %v2109, %v2071
        %v2111 = vsel %vm358, %v2110, %v2075
        %v2112 = vsel %vm346, %v2024, %v2079
        %v2113 = vsel %vm348, %v2112, %v2083
        %v2114 = vsel %vm350, %v2113, %v2087
        %v2115 = vsel %vm352, %v2114, %v2091
        %v2116 = vsel %vm354, %v2115, %v2095
        %v2117 = vsel %vm356, %v2116, %v2099
        %v2118 = vsel %vm358, %v2117, %v2103
        %2119 = vst [vmem:[#allocation2 + $0x40] sm:$0xf] %v2111
        %2120 = vst [vmem:[#allocation2 + $0x48] sm:$0xf] %v2118
        %v2121 = vld [vmem:[%s1] sm:$0xff]
        %v2122 = vld [vmem:[#allocation2] sm:$0xff]
        %v2123 = vld [vmem:[#allocation2 + $0x8] sm:$0xff]
        %v2124 = vld [vmem:[#allocation2 + $0x10] sm:$0xff]
        %v2125 = vld [vmem:[#allocation2 + $0x18] sm:$0xff]
        %v2126 = vld [vmem:[#allocation2 + $0x20] sm:$0xff]
        %v2127 = vld [vmem:[#allocation2 + $0x28] sm:$0xff]
        %v2128 = vld [vmem:[#allocation2 + $0x30] sm:$0xff]
        %v2129 = vld [vmem:[#allocation2 + $0x38] sm:$0xff]
        %v2130 = vld [vmem:[#allocation2 + $0x40] sm:$0xf]
        %v2131 = vld [vmem:[#allocation2 + $0x48] sm:$0xf]
        %v2132 = vld [vmem:[%s2] sm:$0xff]
        %2134 = vset.pattern.permute.xlu0 0
        %2135 = vperm.xlu0 %2134, %v2132
        %v2136 = vpop.permute.xlu0 %2135
        %vm2138 = vcmask 293888
        %v2140 = vsel %vm2138, %v2121, 0
        %vm2142 = vcmask 1043456
        %v2144 = vsel %vm2142, %v2130, 0
        %v2147 = vsel %vm2142, %v2131, 0
        %2149 = vmatpush.msra.mxu0 0.0
        %2150 = vmatpush.msra.mxu0 0.0
        %2151 = vmatpush.msra.mxu0 0.0
        %2152 = vmatpush.msra.mxu0 0.0
        %2153 = vmatpush.msra.mxu0 0.0
        %2154 = vmatpush.msra.mxu0 0.0
        %2155 = vmatpush.msra.mxu0 0.0
        %2156 = vmatpush.msra.mxu0 0.0
        %2157 = vmatpush.msra.mxu0 0.0
        %2158 = vmatpush.msra.mxu0 0.0
        %2159 = vmatpush.msra.mxu0 0.0
        %2160 = vmatpush.msra.mxu0 %v2144
        %2161 = vmatpush.msra.mxu0 %v2128
        %2162 = vmatpush.msra.mxu0 %v2126
        %2163 = vmatpush.msra.mxu0 %v2124
        %2164 = vmatpush.msra.mxu0 %v2122
        %2165 = vmatmul.f32.gmra.mxu0 %v2140
        %v2166 = vpop.f32.mrf.mxu0
        %v2167 = vadd.f32 %v2136, %v2166
        %2168 = vdwg.mxu0
        %2169 = vmatpush.msra.mxu0 0.0
        %2170 = vmatpush.msra.mxu0 0.0
        %2171 = vmatpush.msra.mxu0 0.0
        %2172 = vmatpush.msra.mxu0 0.0
        %2173 = vmatpush.msra.mxu0 0.0
        %2174 = vmatpush.msra.mxu0 0.0
        %2175 = vmatpush.msra.mxu0 0.0
        %2176 = vmatpush.msra.mxu0 0.0
        %2177 = vmatpush.msra.mxu0 0.0
        %2178 = vmatpush.msra.mxu0 0.0
        %2179 = vmatpush.msra.mxu0 0.0
        %2180 = vmatpush.msra.mxu0 %v2147
        %2181 = vmatpush.msra.mxu0 %v2129
        %2182 = vmatpush.msra.mxu0 %v2127
        %2183 = vmatpush.msra.mxu0 %v2125
        %2184 = vmatpush.msra.mxu0 %v2123
        %2185 = vmatmul.f32.gmra.mxu0 %v2140
        %v2186 = vpop.f32.mrf.mxu0
        %v2187 = vadd.f32 %v2136, %v2186
        %2188 = vdwg.mxu0
        %2189 = vst [vmem:[%s163] sm:$0xff] %v2167
        %2190 = vst [vmem:[%s163 + $0x8] sm:$0xff] %v2187
        %s2191 = sand.u32 %s93, 1
        %s2192 = scalar_lea.sflag [#allocation4], %s2191
        %s2193 = sand.u32 %s93, 1
        %s2194 = smul.addr %s2193, 16
        %s2195 = scalar_lea.vmem [#allocation3], %s2194
        // Predicated region
        $region33: #{tpu_custom_call.1} parent=31 // pred_check
          %p2196 = pneg %p103
        $region34: #{tpu_custom_call.1} parent=31 // pred_check_branch
          %2198 = sbr.rel (%p2196) target = $region36
        $region35: #{tpu_custom_call.1} parent=31 // pred_region
          %2200 = vsyncadd %s2192, 0
          %s2201 = smul.addr %s17, 2
          %s2202 = smul.addr %s2201, 8
          %s2203 = scalar_lea.hbm %s3, %s2202
          %s2205 = sshll.u32 %s2195, 4
          %s2206 = int_to_ptr.vmem [resolvable:$true] %s2205
          %s2207 = sshll.u32 %s2203, 4
          %s2208 = int_to_ptr.hbm [resolvable:$true] %s2207
          %2210 = dma.vmem_to_hbm [thread:$0]  %s2206, 256, %s2208, %s2192
        $region36: #{tpu_custom_call.1} parent=31 // pred_fallthru
          _
      $region32: #{tpu_custom_call.1} parent=5 // pred_fallthru
        _
      %p2211 = scmp.le.s32.totalorder 2, %s12
      // Predicated region
      $region37: #{tpu_custom_call.1} parent=5 // pred_check
        %p2212 = pneg %p2211
      $region38: #{tpu_custom_call.1} parent=5 // pred_check_branch
        %2214 = sbr.rel (%p2212) target = $region40
      $region39: #{tpu_custom_call.1} parent=5 // pred_region
        %s2215 = ssub.s32 %s12, 2
        // Predicated region
        $region41: #{tpu_custom_call.1} parent=39 // pred_check
          %p2216 = pneg %p109
        $region42: #{tpu_custom_call.1} parent=39 // pred_check_branch
          %2218 = sbr.rel (%p2216) target = $region44
        $region43: #{tpu_custom_call.1} parent=39 // pred_region
          %s2219 = sand.u32 %s94, 1
          %s2220 = scalar_lea.sflag [#allocation4], %s2219
          %s2221 = sand.u32 %s94, 1
          %s2222 = smul.addr %s2221, 16
          %s2223 = scalar_lea.vmem [#allocation3], %s2222
          %2225 = dma.done %s2220, 256
        $region44: #{tpu_custom_call.1} parent=39 // pred_fallthru
          _
      $region40: #{tpu_custom_call.1} parent=5 // pred_fallthru
        _
    $region6: #{tpu_custom_call.1} parent=1 // loop_footer
      %s16 = sadd.s32 1, %s12
    $region7: #{tpu_custom_call.1} parent=1 // loop_footer_branch
      %11 = sbr.rel target = $region3
    $region8: #{tpu_custom_call.1} parent=1 // loop_exit
      _
    %2226 = vsyncpa [#allocation4], 1
    %s2227 = scalar_lea.sflag [#allocation4], 1
    %2228 = vsyncpa %s2227, 1

</llo_original>
